<compile_context>
chip_gen: v6e
topology: v6e:2x2x1
jax: 0.10.0
libtpu: 0.0.40
codegen_flags: <defaults>
</compile_context>

<pallas_src>
import functools

import jax
import jax.numpy as jnp
from jax.experimental import pallas as pl
from jax.experimental.pallas import tpu as pltpu

EPS = 1e-5
MXU_DTYPE = jnp.bfloat16   # MXU operand dtype (jnp.float32 for exact-f32 path)


# ----------------------------- Pallas kernels ------------------------------

def _conv_bn_relu_kernel(p_ref, w_ref, g_ref, b_ref, o_ref, *, inv_m):
    """y = W(Cout,K) @ P(K,M) on the MXU, fused training-mode BN + ReLU.

    Channel-major: output block is (Cout, M) -> lane-dense stores; the
    per-channel BN stats are cross-lane reductions (XLU)."""
    y = jnp.dot(w_ref[...], p_ref[...], preferred_element_type=jnp.float32)
    mean = jnp.sum(y, axis=1, keepdims=True) * inv_m
    var = jnp.sum(jnp.square(y - mean), axis=1, keepdims=True) * inv_m
    y = (y - mean) * jax.lax.rsqrt(var + EPS) * g_ref[...] + b_ref[...]
    o_ref[...] = jnp.maximum(y, 0.0).astype(o_ref.dtype)


def _fused_stage2_kernel(p2_ref, w2_ref, g1_ref, b1_ref,
                         p3_ref, w3_ref, g2_ref, b2_ref, o_ref, *, inv_m):
    """Fused second stage:  relu( bn1b(conv1b(h)) + bn2a(convT2a(x)) ).

    Two MXU matmuls (3x3 conv branch, 1x1 transposed-conv branch on
    zero-stuffed patches); BN + residual add + final ReLU as epilogue, so
    ha / hb never hit HBM."""
    ya = jnp.dot(w2_ref[...], p2_ref[...], preferred_element_type=jnp.float32)
    ma = jnp.sum(ya, axis=1, keepdims=True) * inv_m
    va = jnp.sum(jnp.square(ya - ma), axis=1, keepdims=True) * inv_m
    ha = (ya - ma) * jax.lax.rsqrt(va + EPS) * g1_ref[...] + b1_ref[...]

    yb = jnp.dot(w3_ref[...], p3_ref[...], preferred_element_type=jnp.float32)
    mb = jnp.sum(yb, axis=1, keepdims=True) * inv_m
    vb = jnp.sum(jnp.square(yb - mb), axis=1, keepdims=True) * inv_m
    hb = (yb - mb) * jax.lax.rsqrt(vb + EPS) * g2_ref[...] + b2_ref[...]

    o_ref[...] = jnp.maximum(ha + hb, 0.0)


# --------------------------- pallas_call wrappers ---------------------------

def _full_spec(shape):
    # single-block spec; block == full array so no (8,128) divisibility issue
    return pl.BlockSpec(shape, lambda i: (0,) * len(shape))


def conv_bn_relu(p, w, gamma, beta, out_dtype):
    K, M = p.shape
    Cout = w.shape[0]
    kern = functools.partial(_conv_bn_relu_kernel, inv_m=1.0 / M)
    return pl.pallas_call(
        kern,
        out_shape=jax.ShapeDtypeStruct((Cout, M), out_dtype),
        grid=(1,),
        in_specs=[_full_spec((K, M)), _full_spec((Cout, K)),
                  _full_spec((Cout, 1)), _full_spec((Cout, 1))],
        out_specs=_full_spec((Cout, M)),
        compiler_params=pltpu.CompilerParams(
            dimension_semantics=("arbitrary",)),
    )(p, w, gamma.reshape(-1, 1).astype(jnp.float32),
      beta.reshape(-1, 1).astype(jnp.float32))


def fused_stage2(p2, w2, g1, b1, p3, w3, g2, b2):
    K2, M = p2.shape
    K3 = p3.shape[0]
    Cout = w2.shape[0]
    kern = functools.partial(_fused_stage2_kernel, inv_m=1.0 / M)
    return pl.pallas_call(
        kern,
        out_shape=jax.ShapeDtypeStruct((Cout, M), jnp.float32),
        grid=(1,),
        in_specs=[_full_spec((K2, M)), _full_spec((Cout, K2)),
                  _full_spec((Cout, 1)), _full_spec((Cout, 1)),
                  _full_spec((K3, M)), _full_spec((Cout, K3)),
                  _full_spec((Cout, 1)), _full_spec((Cout, 1))],
        out_specs=_full_spec((Cout, M)),
        compiler_params=pltpu.CompilerParams(
            dimension_semantics=("arbitrary",)),
    )(p2, w2, g1.reshape(-1, 1).astype(jnp.float32),
      b1.reshape(-1, 1).astype(jnp.float32),
      p3, w3, g2.reshape(-1, 1).astype(jnp.float32),
      b2.reshape(-1, 1).astype(jnp.float32))


# ------------------------------- JAX glue -----------------------------------

def _im2col_cm(xp, kh, kw, ho, wo):
    """Channel-major im2col.  xp: (C, N, Hp, Wp) already padded/dilated.
    Returns (C*kh*kw, N*ho*wo); row order (c, ki, kj) matches OIHW weight
    flattening, column order (n, ho, wo).  Pure slices + concat, no transpose."""
    c, n, _, _ = xp.shape
    cols = [xp[:, :, ki:ki + ho, kj:kj + wo]
            for ki in range(kh) for kj in range(kw)]
    return jnp.stack(cols, axis=1).reshape(c * kh * kw, n * ho * wo)


def _convT_patches(x_cm, k, stride, pad, out_pad):
    """Patches for ConvTranspose2d(k, stride, pad, output_padding) expressed
    as a stride-1 conv over the zero-stuffed input.  x_cm: (C, N, H, W)."""
    c, n, h, w = x_cm.shape
    hd, wd = (h - 1) * stride + 1, (w - 1) * stride + 1
    xd = jnp.zeros((c, n, hd, wd), x_cm.dtype)
    xd = xd.at[:, :, ::stride, ::stride].set(x_cm)
    lo, hi = k - 1 - pad, k - 1 - pad + out_pad
    xp = jnp.pad(xd, ((0, 0), (0, 0), (lo, hi), (lo, hi)))
    ho, wo = hd + lo + hi - k + 1, wd + lo + hi - k + 1
    return _im2col_cm(xp, k, k, ho, wo), ho, wo


def _conv_patches(x_cm, k, pad):
    """Patches for a stride-1 Conv2d(k, padding=pad).  x_cm: (C, N, H, W)."""
    c, n, h, w = x_cm.shape
    xp = jnp.pad(x_cm, ((0, 0), (0, 0), (pad, pad), (pad, pad)))
    ho, wo = h + 2 * pad - k + 1, w + 2 * pad - k + 1
    return _im2col_cm(xp, k, k, ho, wo)


def _convT_weight(w_t):
    """(Cin, Cout, k, k) ConvTranspose2d weight -> equivalent stride-1 conv
    weight flattened to (Cout, Cin*k*k) with (cin, ki, kj) feature order."""
    cout = w_t.shape[1]
    return jnp.flip(w_t, axis=(2, 3)).transpose(1, 0, 2, 3).reshape(cout, -1)


@jax.jit
def upsample_block(x, params):
    """Forward pass of UpsampleBlock.  x: (N, Cin, H, W) f32 NCHW.
    Returns (N, Cout, 2H, 2W) f32."""
    n, cin, h, w = x.shape
    cout = params["w1a"].shape[1]

    # channel-major + MXU dtype once, up front (tiny transpose of the input)
    x_cm = x.transpose(1, 0, 2, 3).astype(MXU_DTYPE)            # (Cin, N, H, W)

    # stage 1: convT1a(5x5, s2, p2, op1) -> bn1a -> relu
    p1, ho, wo = _convT_patches(x_cm, 5, 2, 2, 1)               # (Cin*25, M)
    w1 = _convT_weight(params["w1a"]).astype(MXU_DTYPE)         # (Cout, Cin*25)
    hcm = conv_bn_relu(p1, w1, params["g1a"], params["b1a"],
                       out_dtype=MXU_DTYPE)                     # (Cout, M) lane-dense

    # stage 2 (fused): conv1b(3x3)->bn1b  (+)  convT2a(1x1,s2,op1)->bn2a -> add -> relu
    p2 = _conv_patches(hcm.reshape(cout, n, ho, wo), 3, 1)      # (Cout*9, M)
    w2 = params["w1b"].reshape(cout, -1).astype(MXU_DTYPE)      # (Cout, Cout*9)
    p3, _, _ = _convT_patches(x_cm, 1, 2, 0, 1)                 # (Cin, M) zero-stuffed x
    w3 = _convT_weight(params["w2a"]).astype(MXU_DTYPE)         # (Cout, Cin)
    out_cm = fused_stage2(p2, w2, params["g1b"], params["b1b"],
                          p3, w3, params["g2a"], params["b2a"])  # (Cout, M) f32

    return out_cm.reshape(cout, n, ho, wo).transpose(1, 0, 2, 3)


# ------------------------------ reference -----------------------------------

def ref_forward(x, params, mxu_dtype=jnp.float32):
    """Pure-JAX/XLA reference for UpsampleBlock.  `mxu_dtype` mirrors the
    kernel's MXU-operand precision (conv inputs in mxu_dtype, f32 accumulation,
    f32 BN/ReLU); pass jnp.float32 for the exact PyTorch-f32 semantics."""
    cast = lambda a: a.astype(mxu_dtype)
    dn = ("NCHW", "OIHW", "NCHW")

    def convT(x, w_t, stride, pad, out_pad):
        k = w_t.shape[-1]
        w = jnp.flip(w_t, axis=(2, 3)).transpose(1, 0, 2, 3)
        lo = k - 1 - pad
        return jax.lax.conv_general_dilated(
            cast(x), cast(w), window_strides=(1, 1),
            padding=((lo, lo + out_pad), (lo, lo + out_pad)),
            lhs_dilation=(stride, stride), dimension_numbers=dn,
            preferred_element_type=jnp.float32)

    def conv(x, w, stride, pad):
        return jax.lax.conv_general_dilated(
            cast(x), cast(w), (stride, stride), ((pad, pad), (pad, pad)),
            dimension_numbers=dn, preferred_element_type=jnp.float32)

    def bn(y, g, b):
        mean = jnp.mean(y, axis=(0, 2, 3), keepdims=True)
        var = jnp.mean(jnp.square(y - mean), axis=(0, 2, 3), keepdims=True)
        return ((y - mean) * jax.lax.rsqrt(var + EPS)
                * g.reshape(1, -1, 1, 1) + b.reshape(1, -1, 1, 1))

    relu = lambda z: jnp.maximum(z, 0.0)
    ha = relu(bn(convT(x, params["w1a"], 2, 2, 1), params["g1a"], params["b1a"]))
    ha = cast(ha).astype(jnp.float32)  # kernel keeps this intermediate in MXU dtype
    ha = bn(conv(ha, params["w1b"], 1, 1), params["g1b"], params["b1b"])
    hb = bn(convT(x, params["w2a"], 2, 0, 1), params["g2a"], params["b2a"])
    return relu(ha + hb)


# -------------------------------- main ---------------------------------------

if __name__ == "__main__":
    key = jax.random.PRNGKey(0)
    N, Cin, H, W = 2, 4, 16, 16
    Cout = 8

    ks = jax.random.split(key, 10)
    params = {
        # ConvTranspose2d weights use the PyTorch (Cin, Cout, kh, kw) layout;
        # the Conv2d weight uses (Cout, Cin, kh, kw).
        "w1a": 0.1 * jax.random.normal(ks[0], (Cin, Cout, 5, 5), jnp.float32),
        "w1b": 0.1 * jax.random.normal(ks[1], (Cout, Cout, 3, 3), jnp.float32),
        "w2a": 0.1 * jax.random.normal(ks[2], (Cin, Cout, 1, 1), jnp.float32),
        "g1a": 1.0 + 0.1 * jax.random.normal(ks[3], (Cout,), jnp.float32),
        "b1a": 0.1 * jax.random.normal(ks[4], (Cout,), jnp.float32),
        "g1b": 1.0 + 0.1 * jax.random.normal(ks[5], (Cout,), jnp.float32),
        "b1b": 0.1 * jax.random.normal(ks[6], (Cout,), jnp.float32),
        "g2a": 1.0 + 0.1 * jax.random.normal(ks[7], (Cout,), jnp.float32),
        "b2a": 0.1 * jax.random.normal(ks[8], (Cout,), jnp.float32),
    }
    x = jax.random.normal(ks[9], (N, Cin, H, W), jnp.float32)

    out = jax.block_until_ready(upsample_block(x, params))
    ref = jax.block_until_ready(ref_forward(x, params, MXU_DTYPE))

    assert out.shape == (N, Cout, 2 * H, 2 * W), out.shape
    assert jnp.allclose(out, ref, atol=1e-2, rtol=1e-2), (
        float(jnp.max(jnp.abs(out - ref))))
    print("KERNEL_OK")
</pallas_src>

<mosaic_0001>
module attributes {stable_mosaic.version = 11 : i64} {
  func.func @_conv_bn_relu_kernel(%arg0: i32, %arg1: memref<100x2048xbf16, #tpu.memory_space<vmem>>, %arg2: memref<8x100xbf16, #tpu.memory_space<vmem>>, %arg3: memref<8x1xf32, #tpu.memory_space<vmem>>, %arg4: memref<8x1xf32, #tpu.memory_space<vmem>>, %arg5: memref<8x2048xbf16, #tpu.memory_space<vmem>>) attributes {dimension_semantics = [#tpu.dimension_semantics<arbitrary>], iteration_bounds = array<i64: 1>, scalar_prefetch = 0 : i64, scratch_operands = 0 : i64, tpu.core_type = #tpu.core_type<tc>, window_params = [{pipeline_mode = #tpu.pipeline_mode<synchronous>, transform_indices = @transform_0, window_bounds = array<i64: 100, 2048>}, {pipeline_mode = #tpu.pipeline_mode<synchronous>, transform_indices = @transform_1, window_bounds = array<i64: 8, 100>}, {pipeline_mode = #tpu.pipeline_mode<synchronous>, transform_indices = @transform_2, window_bounds = array<i64: 8, 1>}, {pipeline_mode = #tpu.pipeline_mode<synchronous>, transform_indices = @transform_3, window_bounds = array<i64: 8, 1>}, {pipeline_mode = #tpu.pipeline_mode<synchronous>, transform_indices = @transform_4, window_bounds = array<i64: 8, 2048>}]} {
    %c0 = arith.constant 0 : index
    %c0_0 = arith.constant 0 : index
    %0 = vector.load %arg2[%c0, %c0_0] : memref<8x100xbf16, #tpu.memory_space<vmem>>, vector<8x100xbf16>
    %c0_1 = arith.constant 0 : index
    %c0_2 = arith.constant 0 : index
    %1 = vector.load %arg1[%c0_1, %c0_2] : memref<100x2048xbf16, #tpu.memory_space<vmem>>, vector<100x2048xbf16>
    %cst = arith.constant dense<0.000000e+00> : vector<8x2048xf32>
    %2 = tpu.matmul %0, %1, %cst {dimension_numbers = #tpu.dot_dimension_numbers<[1], [0], [0], [1], [0, 0, 1, 1], [], []>} : vector<8x100xbf16>, vector<100x2048xbf16>, vector<8x2048xf32> -> vector<8x2048xf32>
    %cst_3 = arith.constant dense<0.000000e+00> : vector<8xf32>
    %3 = vector.multi_reduction <add>, %2, %cst_3 [1] : vector<8x2048xf32> to vector<8xf32>
    %4 = vector.shape_cast %3 : vector<8xf32> to vector<8x1xf32>
    %cst_4 = arith.constant 4.8828125E-4 : f32
    %5 = vector.broadcast %cst_4 : f32 to vector<8x1xf32>
    %6 = arith.mulf %4, %5 : vector<8x1xf32>
    %7 = vector.broadcast %6 : vector<8x1xf32> to vector<8x2048xf32>
    %8 = arith.subf %2, %7 : vector<8x2048xf32>
    %9 = arith.mulf %8, %8 : vector<8x2048xf32>
    %cst_5 = arith.constant dense<0.000000e+00> : vector<8xf32>
    %10 = vector.multi_reduction <add>, %9, %cst_5 [1] : vector<8x2048xf32> to vector<8xf32>
    %11 = vector.shape_cast %10 : vector<8xf32> to vector<8x1xf32>
    %cst_6 = arith.constant 4.8828125E-4 : f32
    %12 = vector.broadcast %cst_6 : f32 to vector<8x1xf32>
    %13 = arith.mulf %11, %12 : vector<8x1xf32>
    %14 = vector.broadcast %6 : vector<8x1xf32> to vector<8x2048xf32>
    %15 = arith.subf %2, %14 : vector<8x2048xf32>
    %cst_7 = arith.constant 9.99999974E-6 : f32
    %16 = vector.broadcast %cst_7 : f32 to vector<8x1xf32>
    %17 = arith.addf %13, %16 : vector<8x1xf32>
    %18 = math.rsqrt %17 : vector<8x1xf32>
    %19 = vector.broadcast %18 : vector<8x1xf32> to vector<8x2048xf32>
    %20 = arith.mulf %15, %19 : vector<8x2048xf32>
    %c0_8 = arith.constant 0 : index
    %c0_9 = arith.constant 0 : index
    %21 = vector.load %arg3[%c0_8, %c0_9] : memref<8x1xf32, #tpu.memory_space<vmem>>, vector<8x1xf32>
    %22 = vector.broadcast %21 : vector<8x1xf32> to vector<8x2048xf32>
    %23 = arith.mulf %20, %22 : vector<8x2048xf32>
    %c0_10 = arith.constant 0 : index
    %c0_11 = arith.constant 0 : index
    %24 = vector.load %arg4[%c0_10, %c0_11] : memref<8x1xf32, #tpu.memory_space<vmem>>, vector<8x1xf32>
    %25 = vector.broadcast %24 : vector<8x1xf32> to vector<8x2048xf32>
    %26 = arith.addf %23, %25 : vector<8x2048xf32>
    %cst_12 = arith.constant 0.000000e+00 : f32
    %27 = vector.broadcast %cst_12 : f32 to vector<8x2048xf32>
    %28 = arith.maximumf %26, %27 : vector<8x2048xf32>
    %29 = arith.truncf %28 : vector<8x2048xf32> to vector<8x2048xbf16>
    %c0_13 = arith.constant 0 : index
    %c0_14 = arith.constant 0 : index
    %30 = vector.load %arg5[%c0_13, %c0_14] : memref<8x2048xbf16, #tpu.memory_space<vmem>>, vector<8x2048xbf16>
    tpu.vector_store %arg5[%c0_13, %c0_14], %29 {strides = array<i32>} : memref<8x2048xbf16, #tpu.memory_space<vmem>>, vector<8x2048xbf16>,
    return
  }
  func.func @transform_0(%arg0: i32) -> (i32, i32) {
    %c0_i32 = arith.constant 0 : i32
    %c0_i32_0 = arith.constant 0 : i32
    %c0_i32_1 = arith.constant 0 : i32
    return %c0_i32, %c0_i32_0 : i32, i32
  }
  func.func @transform_1(%arg0: i32) -> (i32, i32) {
    %c0_i32 = arith.constant 0 : i32
    %c0_i32_0 = arith.constant 0 : i32
    %c0_i32_1 = arith.constant 0 : i32
    return %c0_i32, %c0_i32_0 : i32, i32
  }
  func.func @transform_2(%arg0: i32) -> (i32, i32) {
    %c0_i32 = arith.constant 0 : i32
    %c0_i32_0 = arith.constant 0 : i32
    %c0_i32_1 = arith.constant 0 : i32
    return %c0_i32, %c0_i32_0 : i32, i32
  }
  func.func @transform_3(%arg0: i32) -> (i32, i32) {
    %c0_i32 = arith.constant 0 : i32
    %c0_i32_0 = arith.constant 0 : i32
    %c0_i32_1 = arith.constant 0 : i32
    return %c0_i32, %c0_i32_0 : i32, i32
  }
  func.func @transform_4(%arg0: i32) -> (i32, i32) {
    %c0_i32 = arith.constant 0 : i32
    %c0_i32_0 = arith.constant 0 : i32
    %c0_i32_1 = arith.constant 0 : i32
    return %c0_i32, %c0_i32_0 : i32, i32
  }
}

module attributes {stable_mosaic.version = 11 : i64} {
  func.func @_fused_stage2_kernel(%arg0: i32, %arg1: memref<72x2048xbf16, #tpu.memory_space<vmem>>, %arg2: memref<8x72xbf16, #tpu.memory_space<vmem>>, %arg3: memref<8x1xf32, #tpu.memory_space<vmem>>, %arg4: memref<8x1xf32, #tpu.memory_space<vmem>>, %arg5: memref<4x2048xbf16, #tpu.memory_space<vmem>>, %arg6: memref<8x4xbf16, #tpu.memory_space<vmem>>, %arg7: memref<8x1xf32, #tpu.memory_space<vmem>>, %arg8: memref<8x1xf32, #tpu.memory_space<vmem>>, %arg9: memref<8x2048xf32, #tpu.memory_space<vmem>>) attributes {dimension_semantics = [#tpu.dimension_semantics<arbitrary>], iteration_bounds = array<i64: 1>, scalar_prefetch = 0 : i64, scratch_operands = 0 : i64, tpu.core_type = #tpu.core_type<tc>, window_params = [{pipeline_mode = #tpu.pipeline_mode<synchronous>, transform_indices = @transform_0, window_bounds = array<i64: 72, 2048>}, {pipeline_mode = #tpu.pipeline_mode<synchronous>, transform_indices = @transform_1, window_bounds = array<i64: 8, 72>}, {pipeline_mode = #tpu.pipeline_mode<synchronous>, transform_indices = @transform_2, window_bounds = array<i64: 8, 1>}, {pipeline_mode = #tpu.pipeline_mode<synchronous>, transform_indices = @transform_3, window_bounds = array<i64: 8, 1>}, {pipeline_mode = #tpu.pipeline_mode<synchronous>, transform_indices = @transform_4, window_bounds = array<i64: 4, 2048>}, {pipeline_mode = #tpu.pipeline_mode<synchronous>, transform_indices = @transform_5, window_bounds = array<i64: 8, 4>}, {pipeline_mode = #tpu.pipeline_mode<synchronous>, transform_indices = @transform_6, window_bounds = array<i64: 8, 1>}, {pipeline_mode = #tpu.pipeline_mode<synchronous>, transform_indices = @transform_7, window_bounds = array<i64: 8, 1>}, {pipeline_mode = #tpu.pipeline_mode<synchronous>, transform_indices = @transform_8, window_bounds = array<i64: 8, 2048>}]} {
    %c0 = arith.constant 0 : index
    %c0_0 = arith.constant 0 : index
    %0 = vector.load %arg2[%c0, %c0_0] : memref<8x72xbf16, #tpu.memory_space<vmem>>, vector<8x72xbf16>
    %c0_1 = arith.constant 0 : index
    %c0_2 = arith.constant 0 : index
    %1 = vector.load %arg1[%c0_1, %c0_2] : memref<72x2048xbf16, #tpu.memory_space<vmem>>, vector<72x2048xbf16>
    %cst = arith.constant dense<0.000000e+00> : vector<8x2048xf32>
    %2 = tpu.matmul %0, %1, %cst {dimension_numbers = #tpu.dot_dimension_numbers<[1], [0], [0], [1], [0, 0, 1, 1], [], []>} : vector<8x72xbf16>, vector<72x2048xbf16>, vector<8x2048xf32> -> vector<8x2048xf32>
    %cst_3 = arith.constant dense<0.000000e+00> : vector<8xf32>
    %3 = vector.multi_reduction <add>, %2, %cst_3 [1] : vector<8x2048xf32> to vector<8xf32>
    %4 = vector.shape_cast %3 : vector<8xf32> to vector<8x1xf32>
    %cst_4 = arith.constant 4.8828125E-4 : f32
    %5 = vector.broadcast %cst_4 : f32 to vector<8x1xf32>
    %6 = arith.mulf %4, %5 : vector<8x1xf32>
    %7 = vector.broadcast %6 : vector<8x1xf32> to vector<8x2048xf32>
    %8 = arith.subf %2, %7 : vector<8x2048xf32>
    %9 = arith.mulf %8, %8 : vector<8x2048xf32>
    %cst_5 = arith.constant dense<0.000000e+00> : vector<8xf32>
    %10 = vector.multi_reduction <add>, %9, %cst_5 [1] : vector<8x2048xf32> to vector<8xf32>
    %11 = vector.shape_cast %10 : vector<8xf32> to vector<8x1xf32>
    %cst_6 = arith.constant 4.8828125E-4 : f32
    %12 = vector.broadcast %cst_6 : f32 to vector<8x1xf32>
    %13 = arith.mulf %11, %12 : vector<8x1xf32>
    %14 = vector.broadcast %6 : vector<8x1xf32> to vector<8x2048xf32>
    %15 = arith.subf %2, %14 : vector<8x2048xf32>
    %cst_7 = arith.constant 9.99999974E-6 : f32
    %16 = vector.broadcast %cst_7 : f32 to vector<8x1xf32>
    %17 = arith.addf %13, %16 : vector<8x1xf32>
    %18 = math.rsqrt %17 : vector<8x1xf32>
    %19 = vector.broadcast %18 : vector<8x1xf32> to vector<8x2048xf32>
    %20 = arith.mulf %15, %19 : vector<8x2048xf32>
    %c0_8 = arith.constant 0 : index
    %c0_9 = arith.constant 0 : index
    %21 = vector.load %arg3[%c0_8, %c0_9] : memref<8x1xf32, #tpu.memory_space<vmem>>, vector<8x1xf32>
    %22 = vector.broadcast %21 : vector<8x1xf32> to vector<8x2048xf32>
    %23 = arith.mulf %20, %22 : vector<8x2048xf32>
    %c0_10 = arith.constant 0 : index
    %c0_11 = arith.constant 0 : index
    %24 = vector.load %arg4[%c0_10, %c0_11] : memref<8x1xf32, #tpu.memory_space<vmem>>, vector<8x1xf32>
    %25 = vector.broadcast %24 : vector<8x1xf32> to vector<8x2048xf32>
    %26 = arith.addf %23, %25 : vector<8x2048xf32>
    %c0_12 = arith.constant 0 : index
    %c0_13 = arith.constant 0 : index
    %27 = vector.load %arg6[%c0_12, %c0_13] : memref<8x4xbf16, #tpu.memory_space<vmem>>, vector<8x4xbf16>
    %c0_14 = arith.constant 0 : index
    %c0_15 = arith.constant 0 : index
    %28 = vector.load %arg5[%c0_14, %c0_15] : memref<4x2048xbf16, #tpu.memory_space<vmem>>, vector<4x2048xbf16>
    %cst_16 = arith.constant dense<0.000000e+00> : vector<8x2048xf32>
    %29 = tpu.matmul %27, %28, %cst_16 {dimension_numbers = #tpu.dot_dimension_numbers<[1], [0], [0], [1], [0, 0, 1, 1], [], []>} : vector<8x4xbf16>, vector<4x2048xbf16>, vector<8x2048xf32> -> vector<8x2048xf32>
    %cst_17 = arith.constant dense<0.000000e+00> : vector<8xf32>
    %30 = vector.multi_reduction <add>, %29, %cst_17 [1] : vector<8x2048xf32> to vector<8xf32>
    %31 = vector.shape_cast %30 : vector<8xf32> to vector<8x1xf32>
    %cst_18 = arith.constant 4.8828125E-4 : f32
    %32 = vector.broadcast %cst_18 : f32 to vector<8x1xf32>
    %33 = arith.mulf %31, %32 : vector<8x1xf32>
    %34 = vector.broadcast %33 : vector<8x1xf32> to vector<8x2048xf32>
    %35 = arith.subf %29, %34 : vector<8x2048xf32>
    %36 = arith.mulf %35, %35 : vector<8x2048xf32>
    %cst_19 = arith.constant dense<0.000000e+00> : vector<8xf32>
    %37 = vector.multi_reduction <add>, %36, %cst_19 [1] : vector<8x2048xf32> to vector<8xf32>
    %38 = vector.shape_cast %37 : vector<8xf32> to vector<8x1xf32>
    %cst_20 = arith.constant 4.8828125E-4 : f32
    %39 = vector.broadcast %cst_20 : f32 to vector<8x1xf32>
    %40 = arith.mulf %38, %39 : vector<8x1xf32>
    %41 = vector.broadcast %33 : vector<8x1xf32> to vector<8x2048xf32>
    %42 = arith.subf %29, %41 : vector<8x2048xf32>
    %cst_21 = arith.constant 9.99999974E-6 : f32
    %43 = vector.broadcast %cst_21 : f32 to vector<8x1xf32>
    %44 = arith.addf %40, %43 : vector<8x1xf32>
    %45 = math.rsqrt %44 : vector<8x1xf32>
    %46 = vector.broadcast %45 : vector<8x1xf32> to vector<8x2048xf32>
    %47 = arith.mulf %42, %46 : vector<8x2048xf32>
    %c0_22 = arith.constant 0 : index
    %c0_23 = arith.constant 0 : index
    %48 = vector.load %arg7[%c0_22, %c0_23] : memref<8x1xf32, #tpu.memory_space<vmem>>, vector<8x1xf32>
    %49 = vector.broadcast %48 : vector<8x1xf32> to vector<8x2048xf32>
    %50 = arith.mulf %47, %49 : vector<8x2048xf32>
    %c0_24 = arith.constant 0 : index
    %c0_25 = arith.constant 0 : index
    %51 = vector.load %arg8[%c0_24, %c0_25] : memref<8x1xf32, #tpu.memory_space<vmem>>, vector<8x1xf32>
    %52 = vector.broadcast %51 : vector<8x1xf32> to vector<8x2048xf32>
    %53 = arith.addf %50, %52 : vector<8x2048xf32>
    %54 = arith.addf %26, %53 : vector<8x2048xf32>
    %cst_26 = arith.constant 0.000000e+00 : f32
    %55 = vector.broadcast %cst_26 : f32 to vector<8x2048xf32>
    %56 = arith.maximumf %54, %55 : vector<8x2048xf32>
    %c0_27 = arith.constant 0 : index
    %c0_28 = arith.constant 0 : index
    %57 = vector.load %arg9[%c0_27, %c0_28] : memref<8x2048xf32, #tpu.memory_space<vmem>>, vector<8x2048xf32>
    tpu.vector_store %arg9[%c0_27, %c0_28], %56 {strides = array<i32>} : memref<8x2048xf32, #tpu.memory_space<vmem>>, vector<8x2048xf32>,
    return
  }
  func.func @transform_0(%arg0: i32) -> (i32, i32) {
    %c0_i32 = arith.constant 0 : i32
    %c0_i32_0 = arith.constant 0 : i32
    %c0_i32_1 = arith.constant 0 : i32
    return %c0_i32, %c0_i32_0 : i32, i32
  }
  func.func @transform_1(%arg0: i32) -> (i32, i32) {
    %c0_i32 = arith.constant 0 : i32
    %c0_i32_0 = arith.constant 0 : i32
    %c0_i32_1 = arith.constant 0 : i32
    return %c0_i32, %c0_i32_0 : i32, i32
  }
  func.func @transform_2(%arg0: i32) -> (i32, i32) {
    %c0_i32 = arith.constant 0 : i32
    %c0_i32_0 = arith.constant 0 : i32
    %c0_i32_1 = arith.constant 0 : i32
    return %c0_i32, %c0_i32_0 : i32, i32
  }
  func.func @transform_3(%arg0: i32) -> (i32, i32) {
    %c0_i32 = arith.constant 0 : i32
    %c0_i32_0 = arith.constant 0 : i32
    %c0_i32_1 = arith.constant 0 : i32
    return %c0_i32, %c0_i32_0 : i32, i32
  }
  func.func @transform_4(%arg0: i32) -> (i32, i32) {
    %c0_i32 = arith.constant 0 : i32
    %c0_i32_0 = arith.constant 0 : i32
    %c0_i32_1 = arith.constant 0 : i32
    return %c0_i32, %c0_i32_0 : i32, i32
  }
  func.func @transform_5(%arg0: i32) -> (i32, i32) {
    %c0_i32 = arith.constant 0 : i32
    %c0_i32_0 = arith.constant 0 : i32
    %c0_i32_1 = arith.constant 0 : i32
    return %c0_i32, %c0_i32_0 : i32, i32
  }
  func.func @transform_6(%arg0: i32) -> (i32, i32) {
    %c0_i32 = arith.constant 0 : i32
    %c0_i32_0 = arith.constant 0 : i32
    %c0_i32_1 = arith.constant 0 : i32
    return %c0_i32, %c0_i32_0 : i32, i32
  }
  func.func @transform_7(%arg0: i32) -> (i32, i32) {
    %c0_i32 = arith.constant 0 : i32
    %c0_i32_0 = arith.constant 0 : i32
    %c0_i32_1 = arith.constant 0 : i32
    return %c0_i32, %c0_i32_0 : i32, i32
  }
  func.func @transform_8(%arg0: i32) -> (i32, i32) {
    %c0_i32 = arith.constant 0 : i32
    %c0_i32_0 = arith.constant 0 : i32
    %c0_i32_1 = arith.constant 0 : i32
    return %c0_i32, %c0_i32_0 : i32, i32
  }
}

</mosaic_0001>

<llo_original>
// kernel: upsample_block.2
$region0: #{upsample_block.2}
  #allocation0 [shape = 'u32[]', space=smem, size = 0x4, offset = 0x4, fixed_abs, tag = 'smem constant byte address 0x4 - core index']
  #allocation1 [shape = 'u32[144,128]{1,0:T(1,128)}', space=vmem, size = 0x12000, scoped, tag = 'internal scratch']
  %s0 = inlined_call_operand.vmem [shape: bf16[100,2048], index: 0, kind: input, shape index: {}]
  %s1 = inlined_call_operand.vmem [shape: bf16[8,100], index: 1, kind: input, shape index: {}]
  %s2 = inlined_call_operand.vmem [shape: f32[8,1], index: 2, kind: input, shape index: {}]
  %s3 = inlined_call_operand.vmem [shape: f32[8,1], index: 3, kind: input, shape index: {}]
  %s4 = inlined_call_operand.vmem [shape: bf16[8,2048], index: 4, kind: output, shape index: {}]
  %s5 = sld [smem:[#allocation0]]
  $region26: #{upsample_block.2} parent=0
    _
  %s7 = ssub.s32 1, %s5
  %s8 = scalar_select 0, %s7, %s5
  // Predicated region
  $region2: #{upsample_block.2} parent=0 // pred_check
    _
  $region3: #{upsample_block.2} parent=0 // pred_check_branch
    %10 = sbr.rel (0) target = $region5
  $region4: #{upsample_block.2} parent=0 // pred_region
    _
  $region5: #{upsample_block.2} parent=0 // pred_fallthru
    _
  // Predicated region
  $region6: #{upsample_block.2} parent=0 // pred_check
    _
  $region7: #{upsample_block.2} parent=0 // pred_check_branch
    %12 = sbr.rel (0) target = $region9
  $region8: #{upsample_block.2} parent=0 // pred_region
    _
  $region9: #{upsample_block.2} parent=0 // pred_fallthru
    _
  // Predicated region
  $region10: #{upsample_block.2} parent=0 // pred_check
    _
  $region11: #{upsample_block.2} parent=0 // pred_check_branch
    %14 = sbr.rel (0) target = $region13
  $region12: #{upsample_block.2} parent=0 // pred_region
    _
  $region13: #{upsample_block.2} parent=0 // pred_fallthru
    _
  // Predicated region
  $region14: #{upsample_block.2} parent=0 // pred_check
    _
  $region15: #{upsample_block.2} parent=0 // pred_check_branch
    %16 = sbr.rel (0) target = $region17
  $region16: #{upsample_block.2} parent=0 // pred_region
    _
  $region17: #{upsample_block.2} parent=0 // pred_fallthru
    _
  %v18 = vld [vmem:[%s1] sm:$0xf]
  %v19 = vld [vmem:[%s0] sm:$0xff]
  %v20 = vld [vmem:[%s0 + $0x8] sm:$0xff]
  %v21 = vld [vmem:[%s0 + $0x10] sm:$0xff]
  %v22 = vld [vmem:[%s0 + $0x18] sm:$0xff]
  %v23 = vld [vmem:[%s0 + $0x20] sm:$0xff]
  %v24 = vld [vmem:[%s0 + $0x28] sm:$0xff]
  %v25 = vld [vmem:[%s0 + $0x30] sm:$0xff]
  %v26 = vld [vmem:[%s0 + $0x38] sm:$0xff]
  %v27 = vld [vmem:[%s0 + $0x40] sm:$0xff]
  %v28 = vld [vmem:[%s0 + $0x48] sm:$0xff]
  %v29 = vld [vmem:[%s0 + $0x50] sm:$0xff]
  %v30 = vld [vmem:[%s0 + $0x58] sm:$0xff]
  %v31 = vld [vmem:[%s0 + $0x60] sm:$0xff]
  %v32 = vld [vmem:[%s0 + $0x68] sm:$0xff]
  %v33 = vld [vmem:[%s0 + $0x70] sm:$0xff]
  %v34 = vld [vmem:[%s0 + $0x78] sm:$0xff]
  %v35 = vld [vmem:[%s0 + $0x80] sm:$0xff]
  %v36 = vld [vmem:[%s0 + $0x88] sm:$0xff]
  %v37 = vld [vmem:[%s0 + $0x90] sm:$0xff]
  %v38 = vld [vmem:[%s0 + $0x98] sm:$0xff]
  %v39 = vld [vmem:[%s0 + $0xa0] sm:$0xff]
  %v40 = vld [vmem:[%s0 + $0xa8] sm:$0xff]
  %v41 = vld [vmem:[%s0 + $0xb0] sm:$0xff]
  %v42 = vld [vmem:[%s0 + $0xb8] sm:$0xff]
  %v43 = vld [vmem:[%s0 + $0xc0] sm:$0xff]
  %v44 = vld [vmem:[%s0 + $0xc8] sm:$0xff]
  %v45 = vld [vmem:[%s0 + $0xd0] sm:$0xff]
  %v46 = vld [vmem:[%s0 + $0xd8] sm:$0xff]
  %v47 = vld [vmem:[%s0 + $0xe0] sm:$0xff]
  %v48 = vld [vmem:[%s0 + $0xe8] sm:$0xff]
  %v49 = vld [vmem:[%s0 + $0xf0] sm:$0xff]
  %v50 = vld [vmem:[%s0 + $0xf8] sm:$0xff]
  %v51 = vld [vmem:[%s0 + $0x100] sm:$0xff]
  %v52 = vld [vmem:[%s0 + $0x108] sm:$0xff]
  %v53 = vld [vmem:[%s0 + $0x110] sm:$0xff]
  %v54 = vld [vmem:[%s0 + $0x118] sm:$0xff]
  %v55 = vld [vmem:[%s0 + $0x120] sm:$0xff]
  %v56 = vld [vmem:[%s0 + $0x128] sm:$0xff]
  %v57 = vld [vmem:[%s0 + $0x130] sm:$0xff]
  %v58 = vld [vmem:[%s0 + $0x138] sm:$0xff]
  %v59 = vld [vmem:[%s0 + $0x140] sm:$0xff]
  %v60 = vld [vmem:[%s0 + $0x148] sm:$0xff]
  %v61 = vld [vmem:[%s0 + $0x150] sm:$0xff]
  %v62 = vld [vmem:[%s0 + $0x158] sm:$0xff]
  %v63 = vld [vmem:[%s0 + $0x160] sm:$0xff]
  %v64 = vld [vmem:[%s0 + $0x168] sm:$0xff]
  %v65 = vld [vmem:[%s0 + $0x170] sm:$0xff]
  %v66 = vld [vmem:[%s0 + $0x178] sm:$0xff]
  %v67 = vld [vmem:[%s0 + $0x180] sm:$0xff]
  %v68 = vld [vmem:[%s0 + $0x188] sm:$0xff]
  %v69 = vld [vmem:[%s0 + $0x190] sm:$0xff]
  %v70 = vld [vmem:[%s0 + $0x198] sm:$0xff]
  %v71 = vld [vmem:[%s0 + $0x1a0] sm:$0xff]
  %v72 = vld [vmem:[%s0 + $0x1a8] sm:$0xff]
  %v73 = vld [vmem:[%s0 + $0x1b0] sm:$0xff]
  %v74 = vld [vmem:[%s0 + $0x1b8] sm:$0xff]
  %v75 = vld [vmem:[%s0 + $0x1c0] sm:$0xff]
  %v76 = vld [vmem:[%s0 + $0x1c8] sm:$0xff]
  %v77 = vld [vmem:[%s0 + $0x1d0] sm:$0xff]
  %v78 = vld [vmem:[%s0 + $0x1d8] sm:$0xff]
  %v79 = vld [vmem:[%s0 + $0x1e0] sm:$0xff]
  %v80 = vld [vmem:[%s0 + $0x1e8] sm:$0xff]
  %v81 = vld [vmem:[%s0 + $0x1f0] sm:$0xff]
  %v82 = vld [vmem:[%s0 + $0x1f8] sm:$0xff]
  %v83 = vld [vmem:[%s0 + $0x200] sm:$0xff]
  %v84 = vld [vmem:[%s0 + $0x208] sm:$0xff]
  %v85 = vld [vmem:[%s0 + $0x210] sm:$0xff]
  %v86 = vld [vmem:[%s0 + $0x218] sm:$0xff]
  %v87 = vld [vmem:[%s0 + $0x220] sm:$0xff]
  %v88 = vld [vmem:[%s0 + $0x228] sm:$0xff]
  %v89 = vld [vmem:[%s0 + $0x230] sm:$0xff]
  %v90 = vld [vmem:[%s0 + $0x238] sm:$0xff]
  %v91 = vld [vmem:[%s0 + $0x240] sm:$0xff]
  %v92 = vld [vmem:[%s0 + $0x248] sm:$0xff]
  %v93 = vld [vmem:[%s0 + $0x250] sm:$0xff]
  %v94 = vld [vmem:[%s0 + $0x258] sm:$0xff]
  %v95 = vld [vmem:[%s0 + $0x260] sm:$0xff]
  %v96 = vld [vmem:[%s0 + $0x268] sm:$0xff]
  %v97 = vld [vmem:[%s0 + $0x270] sm:$0xff]
  %v98 = vld [vmem:[%s0 + $0x278] sm:$0xff]
  %v99 = vld [vmem:[%s0 + $0x280] sm:$0xff]
  %v100 = vld [vmem:[%s0 + $0x288] sm:$0xff]
  %v101 = vld [vmem:[%s0 + $0x290] sm:$0xff]
  %v102 = vld [vmem:[%s0 + $0x298] sm:$0xff]
  %v103 = vld [vmem:[%s0 + $0x2a0] sm:$0xff]
  %v104 = vld [vmem:[%s0 + $0x2a8] sm:$0xff]
  %v105 = vld [vmem:[%s0 + $0x2b0] sm:$0xff]
  %v106 = vld [vmem:[%s0 + $0x2b8] sm:$0xff]
  %v107 = vld [vmem:[%s0 + $0x2c0] sm:$0xff]
  %v108 = vld [vmem:[%s0 + $0x2c8] sm:$0xff]
  %v109 = vld [vmem:[%s0 + $0x2d0] sm:$0xff]
  %v110 = vld [vmem:[%s0 + $0x2d8] sm:$0xff]
  %v111 = vld [vmem:[%s0 + $0x2e0] sm:$0xff]
  %v112 = vld [vmem:[%s0 + $0x2e8] sm:$0xff]
  %v113 = vld [vmem:[%s0 + $0x2f0] sm:$0xff]
  %v114 = vld [vmem:[%s0 + $0x2f8] sm:$0xff]
  %v115 = vld [vmem:[%s0 + $0x300] sm:$0x33]
  %v116 = vld [vmem:[%s0 + $0x308] sm:$0x33]
  %v117 = vld [vmem:[%s0 + $0x310] sm:$0x33]
  %v118 = vld [vmem:[%s0 + $0x318] sm:$0x33]
  %v119 = vld [vmem:[%s0 + $0x320] sm:$0x33]
  %v120 = vld [vmem:[%s0 + $0x328] sm:$0x33]
  %v121 = vld [vmem:[%s0 + $0x330] sm:$0x33]
  %v122 = vld [vmem:[%s0 + $0x338] sm:$0x33]
  %v227 = vunpack.c.l.b16 %v19
  %v228 = vunpack.c.h.b16 %v19
  %v229 = vunpack.c.l.b16 %v20
  %v230 = vunpack.c.h.b16 %v20
  %v231 = vunpack.c.l.b16 %v21
  %v232 = vunpack.c.h.b16 %v21
  %v233 = vunpack.c.l.b16 %v22
  %v234 = vunpack.c.h.b16 %v22
  %v235 = vunpack.c.l.b16 %v23
  %v236 = vunpack.c.h.b16 %v23
  %v237 = vunpack.c.l.b16 %v24
  %v238 = vunpack.c.h.b16 %v24
  %v239 = vunpack.c.l.b16 %v25
  %v240 = vunpack.c.h.b16 %v25
  %v241 = vunpack.c.l.b16 %v26
  %v242 = vunpack.c.h.b16 %v26
  %v243 = vunpack.c.l.b16 %v27
  %v244 = vunpack.c.h.b16 %v27
  %v245 = vunpack.c.l.b16 %v28
  %v246 = vunpack.c.h.b16 %v28
  %v247 = vunpack.c.l.b16 %v29
  %v248 = vunpack.c.h.b16 %v29
  %v249 = vunpack.c.l.b16 %v30
  %v250 = vunpack.c.h.b16 %v30
  %v251 = vunpack.c.l.b16 %v31
  %v252 = vunpack.c.h.b16 %v31
  %v253 = vunpack.c.l.b16 %v32
  %v254 = vunpack.c.h.b16 %v32
  %v255 = vunpack.c.l.b16 %v33
  %v256 = vunpack.c.h.b16 %v33
  %v257 = vunpack.c.l.b16 %v34
  %v258 = vunpack.c.h.b16 %v34
  %v259 = vunpack.c.l.b16 %v35
  %v260 = vunpack.c.h.b16 %v35
  %v261 = vunpack.c.l.b16 %v36
  %v262 = vunpack.c.h.b16 %v36
  %v263 = vunpack.c.l.b16 %v37
  %v264 = vunpack.c.h.b16 %v37
  %v265 = vunpack.c.l.b16 %v38
  %v266 = vunpack.c.h.b16 %v38
  %v267 = vunpack.c.l.b16 %v39
  %v268 = vunpack.c.h.b16 %v39
  %v269 = vunpack.c.l.b16 %v40
  %v270 = vunpack.c.h.b16 %v40
  %v271 = vunpack.c.l.b16 %v41
  %v272 = vunpack.c.h.b16 %v41
  %v273 = vunpack.c.l.b16 %v42
  %v274 = vunpack.c.h.b16 %v42
  %v275 = vunpack.c.l.b16 %v43
  %v276 = vunpack.c.h.b16 %v43
  %v277 = vunpack.c.l.b16 %v44
  %v278 = vunpack.c.h.b16 %v44
  %v279 = vunpack.c.l.b16 %v45
  %v280 = vunpack.c.h.b16 %v45
  %v281 = vunpack.c.l.b16 %v46
  %v282 = vunpack.c.h.b16 %v46
  %v283 = vunpack.c.l.b16 %v47
  %v284 = vunpack.c.h.b16 %v47
  %v285 = vunpack.c.l.b16 %v48
  %v286 = vunpack.c.h.b16 %v48
  %v287 = vunpack.c.l.b16 %v49
  %v288 = vunpack.c.h.b16 %v49
  %v289 = vunpack.c.l.b16 %v50
  %v290 = vunpack.c.h.b16 %v50
  %v291 = vunpack.c.l.b16 %v51
  %v292 = vunpack.c.h.b16 %v51
  %v293 = vunpack.c.l.b16 %v52
  %v294 = vunpack.c.h.b16 %v52
  %v295 = vunpack.c.l.b16 %v53
  %v296 = vunpack.c.h.b16 %v53
  %v297 = vunpack.c.l.b16 %v54
  %v298 = vunpack.c.h.b16 %v54
  %v299 = vunpack.c.l.b16 %v55
  %v300 = vunpack.c.h.b16 %v55
  %v301 = vunpack.c.l.b16 %v56
  %v302 = vunpack.c.h.b16 %v56
  %v303 = vunpack.c.l.b16 %v57
  %v304 = vunpack.c.h.b16 %v57
  %v305 = vunpack.c.l.b16 %v58
  %v306 = vunpack.c.h.b16 %v58
  %v307 = vunpack.c.l.b16 %v59
  %v308 = vunpack.c.h.b16 %v59
  %v309 = vunpack.c.l.b16 %v60
  %v310 = vunpack.c.h.b16 %v60
  %v311 = vunpack.c.l.b16 %v61
  %v312 = vunpack.c.h.b16 %v61
  %v313 = vunpack.c.l.b16 %v62
  %v314 = vunpack.c.h.b16 %v62
  %v315 = vunpack.c.l.b16 %v63
  %v316 = vunpack.c.h.b16 %v63
  %v317 = vunpack.c.l.b16 %v64
  %v318 = vunpack.c.h.b16 %v64
  %v319 = vunpack.c.l.b16 %v65
  %v320 = vunpack.c.h.b16 %v65
  %v321 = vunpack.c.l.b16 %v66
  %v322 = vunpack.c.h.b16 %v66
  %v323 = vunpack.c.l.b16 %v67
  %v324 = vunpack.c.h.b16 %v67
  %v325 = vunpack.c.l.b16 %v68
  %v326 = vunpack.c.h.b16 %v68
  %v327 = vunpack.c.l.b16 %v69
  %v328 = vunpack.c.h.b16 %v69
  %v329 = vunpack.c.l.b16 %v70
  %v330 = vunpack.c.h.b16 %v70
  %v331 = vunpack.c.l.b16 %v71
  %v332 = vunpack.c.h.b16 %v71
  %v333 = vunpack.c.l.b16 %v72
  %v334 = vunpack.c.h.b16 %v72
  %v335 = vunpack.c.l.b16 %v73
  %v336 = vunpack.c.h.b16 %v73
  %v337 = vunpack.c.l.b16 %v74
  %v338 = vunpack.c.h.b16 %v74
  %v339 = vunpack.c.l.b16 %v75
  %v340 = vunpack.c.h.b16 %v75
  %v341 = vunpack.c.l.b16 %v76
  %v342 = vunpack.c.h.b16 %v76
  %v343 = vunpack.c.l.b16 %v77
  %v344 = vunpack.c.h.b16 %v77
  %v345 = vunpack.c.l.b16 %v78
  %v346 = vunpack.c.h.b16 %v78
  %v347 = vunpack.c.l.b16 %v79
  %v348 = vunpack.c.h.b16 %v79
  %v349 = vunpack.c.l.b16 %v80
  %v350 = vunpack.c.h.b16 %v80
  %v351 = vunpack.c.l.b16 %v81
  %v352 = vunpack.c.h.b16 %v81
  %v353 = vunpack.c.l.b16 %v82
  %v354 = vunpack.c.h.b16 %v82
  %v355 = vunpack.c.l.b16 %v83
  %v356 = vunpack.c.h.b16 %v83
  %v357 = vunpack.c.l.b16 %v84
  %v358 = vunpack.c.h.b16 %v84
  %v359 = vunpack.c.l.b16 %v85
  %v360 = vunpack.c.h.b16 %v85
  %v361 = vunpack.c.l.b16 %v86
  %v362 = vunpack.c.h.b16 %v86
  %v363 = vunpack.c.l.b16 %v87
  %v364 = vunpack.c.h.b16 %v87
  %v365 = vunpack.c.l.b16 %v88
  %v366 = vunpack.c.h.b16 %v88
  %v367 = vunpack.c.l.b16 %v89
  %v368 = vunpack.c.h.b16 %v89
  %v369 = vunpack.c.l.b16 %v90
  %v370 = vunpack.c.h.b16 %v90
  %v371 = vunpack.c.l.b16 %v91
  %v372 = vunpack.c.h.b16 %v91
  %v373 = vunpack.c.l.b16 %v92
  %v374 = vunpack.c.h.b16 %v92
  %v375 = vunpack.c.l.b16 %v93
  %v376 = vunpack.c.h.b16 %v93
  %v377 = vunpack.c.l.b16 %v94
  %v378 = vunpack.c.h.b16 %v94
  %v379 = vunpack.c.l.b16 %v95
  %v380 = vunpack.c.h.b16 %v95
  %v381 = vunpack.c.l.b16 %v96
  %v382 = vunpack.c.h.b16 %v96
  %v383 = vunpack.c.l.b16 %v97
  %v384 = vunpack.c.h.b16 %v97
  %v385 = vunpack.c.l.b16 %v98
  %v386 = vunpack.c.h.b16 %v98
  %v387 = vunpack.c.l.b16 %v99
  %v388 = vunpack.c.h.b16 %v99
  %v389 = vunpack.c.l.b16 %v100
  %v390 = vunpack.c.h.b16 %v100
  %v391 = vunpack.c.l.b16 %v101
  %v392 = vunpack.c.h.b16 %v101
  %v393 = vunpack.c.l.b16 %v102
  %v394 = vunpack.c.h.b16 %v102
  %v395 = vunpack.c.l.b16 %v103
  %v396 = vunpack.c.h.b16 %v103
  %v397 = vunpack.c.l.b16 %v104
  %v398 = vunpack.c.h.b16 %v104
  %v399 = vunpack.c.l.b16 %v105
  %v400 = vunpack.c.h.b16 %v105
  %v401 = vunpack.c.l.b16 %v106
  %v402 = vunpack.c.h.b16 %v106
  %v403 = vunpack.c.l.b16 %v107
  %v404 = vunpack.c.h.b16 %v107
  %v405 = vunpack.c.l.b16 %v108
  %v406 = vunpack.c.h.b16 %v108
  %v407 = vunpack.c.l.b16 %v109
  %v408 = vunpack.c.h.b16 %v109
  %v409 = vunpack.c.l.b16 %v110
  %v410 = vunpack.c.h.b16 %v110
  %v411 = vunpack.c.l.b16 %v111
  %v412 = vunpack.c.h.b16 %v111
  %v413 = vunpack.c.l.b16 %v112
  %v414 = vunpack.c.h.b16 %v112
  %v415 = vunpack.c.l.b16 %v113
  %v416 = vunpack.c.h.b16 %v113
  %v417 = vunpack.c.l.b16 %v114
  %v418 = vunpack.c.h.b16 %v114
  %v419 = vunpack.c.l.b16 %v115
  %v420 = vunpack.c.h.b16 %v115
  %v421 = vunpack.c.l.b16 %v116
  %v422 = vunpack.c.h.b16 %v116
  %v423 = vunpack.c.l.b16 %v117
  %v424 = vunpack.c.h.b16 %v117
  %v425 = vunpack.c.l.b16 %v118
  %v426 = vunpack.c.h.b16 %v118
  %v427 = vunpack.c.l.b16 %v119
  %v428 = vunpack.c.h.b16 %v119
  %v429 = vunpack.c.l.b16 %v120
  %v430 = vunpack.c.h.b16 %v120
  %v431 = vunpack.c.l.b16 %v121
  %v432 = vunpack.c.h.b16 %v121
  %v433 = vunpack.c.l.b16 %v122
  %v434 = vunpack.c.h.b16 %v122
  %v435 = vpack.c.b16 %v243, %v227
  %v436 = vpack.c.b16 %v244, %v228
  %v437 = vpack.c.b16 %v245, %v229
  %v438 = vpack.c.b16 %v246, %v230
  %v439 = vpack.c.b16 %v247, %v231
  %v440 = vpack.c.b16 %v248, %v232
  %v441 = vpack.c.b16 %v249, %v233
  %v442 = vpack.c.b16 %v250, %v234
  %v443 = vpack.c.b16 %v251, %v235
  %v444 = vpack.c.b16 %v252, %v236
  %v445 = vpack.c.b16 %v253, %v237
  %v446 = vpack.c.b16 %v254, %v238
  %v447 = vpack.c.b16 %v255, %v239
  %v448 = vpack.c.b16 %v256, %v240
  %v449 = vpack.c.b16 %v257, %v241
  %v450 = vpack.c.b16 %v258, %v242
  %v451 = vpack.c.b16 %v275, %v259
  %v452 = vpack.c.b16 %v276, %v260
  %v453 = vpack.c.b16 %v277, %v261
  %v454 = vpack.c.b16 %v278, %v262
  %v455 = vpack.c.b16 %v279, %v263
  %v456 = vpack.c.b16 %v280, %v264
  %v457 = vpack.c.b16 %v281, %v265
  %v458 = vpack.c.b16 %v282, %v266
  %v459 = vpack.c.b16 %v283, %v267
  %v460 = vpack.c.b16 %v284, %v268
  %v461 = vpack.c.b16 %v285, %v269
  %v462 = vpack.c.b16 %v286, %v270
  %v463 = vpack.c.b16 %v287, %v271
  %v464 = vpack.c.b16 %v288, %v272
  %v465 = vpack.c.b16 %v289, %v273
  %v466 = vpack.c.b16 %v290, %v274
  %v467 = vpack.c.b16 %v307, %v291
  %v468 = vpack.c.b16 %v308, %v292
  %v469 = vpack.c.b16 %v309, %v293
  %v470 = vpack.c.b16 %v310, %v294
  %v471 = vpack.c.b16 %v311, %v295
  %v472 = vpack.c.b16 %v312, %v296
  %v473 = vpack.c.b16 %v313, %v297
  %v474 = vpack.c.b16 %v314, %v298
  %v475 = vpack.c.b16 %v315, %v299
  %v476 = vpack.c.b16 %v316, %v300
  %v477 = vpack.c.b16 %v317, %v301
  %v478 = vpack.c.b16 %v318, %v302
  %v479 = vpack.c.b16 %v319, %v303
  %v480 = vpack.c.b16 %v320, %v304
  %v481 = vpack.c.b16 %v321, %v305
  %v482 = vpack.c.b16 %v322, %v306
  %v483 = vpack.c.b16 %v339, %v323
  %v484 = vpack.c.b16 %v340, %v324
  %v485 = vpack.c.b16 %v341, %v325
  %v486 = vpack.c.b16 %v342, %v326
  %v487 = vpack.c.b16 %v343, %v327
  %v488 = vpack.c.b16 %v344, %v328
  %v489 = vpack.c.b16 %v345, %v329
  %v490 = vpack.c.b16 %v346, %v330
  %v491 = vpack.c.b16 %v347, %v331
  %v492 = vpack.c.b16 %v348, %v332
  %v493 = vpack.c.b16 %v349, %v333
  %v494 = vpack.c.b16 %v350, %v334
  %v495 = vpack.c.b16 %v351, %v335
  %v496 = vpack.c.b16 %v352, %v336
  %v497 = vpack.c.b16 %v353, %v337
  %v498 = vpack.c.b16 %v354, %v338
  %v499 = vpack.c.b16 %v371, %v355
  %v500 = vpack.c.b16 %v372, %v356
  %v501 = vpack.c.b16 %v373, %v357
  %v502 = vpack.c.b16 %v374, %v358
  %v503 = vpack.c.b16 %v375, %v359
  %v504 = vpack.c.b16 %v376, %v360
  %v505 = vpack.c.b16 %v377, %v361
  %v506 = vpack.c.b16 %v378, %v362
  %v507 = vpack.c.b16 %v379, %v363
  %v508 = vpack.c.b16 %v380, %v364
  %v509 = vpack.c.b16 %v381, %v365
  %v510 = vpack.c.b16 %v382, %v366
  %v511 = vpack.c.b16 %v383, %v367
  %v512 = vpack.c.b16 %v384, %v368
  %v513 = vpack.c.b16 %v385, %v369
  %v514 = vpack.c.b16 %v386, %v370
  %v515 = vpack.c.b16 %v403, %v387
  %v516 = vpack.c.b16 %v404, %v388
  %v517 = vpack.c.b16 %v405, %v389
  %v518 = vpack.c.b16 %v406, %v390
  %v519 = vpack.c.b16 %v407, %v391
  %v520 = vpack.c.b16 %v408, %v392
  %v521 = vpack.c.b16 %v409, %v393
  %v522 = vpack.c.b16 %v410, %v394
  %v523 = vpack.c.b16 %v411, %v395
  %v524 = vpack.c.b16 %v412, %v396
  %v525 = vpack.c.b16 %v413, %v397
  %v526 = vpack.c.b16 %v414, %v398
  %v527 = vpack.c.b16 %v415, %v399
  %v528 = vpack.c.b16 %v416, %v400
  %v529 = vpack.c.b16 %v417, %v401
  %v530 = vpack.c.b16 %v418, %v402
  %v531 = vpack.c.b16 %v419, %v419
  %v532 = vpack.c.b16 %v420, %v420
  %v533 = vpack.c.b16 %v421, %v421
  %v534 = vpack.c.b16 %v422, %v422
  %v535 = vpack.c.b16 %v423, %v423
  %v536 = vpack.c.b16 %v424, %v424
  %v537 = vpack.c.b16 %v425, %v425
  %v538 = vpack.c.b16 %v426, %v426
  %v539 = vpack.c.b16 %v427, %v427
  %v540 = vpack.c.b16 %v428, %v428
  %v541 = vpack.c.b16 %v429, %v429
  %v542 = vpack.c.b16 %v430, %v430
  %v543 = vpack.c.b16 %v431, %v431
  %v544 = vpack.c.b16 %v432, %v432
  %v545 = vpack.c.b16 %v433, %v433
  %v546 = vpack.c.b16 %v434, %v434
  %vm643 = vcmask 818176
  %v645 = vsel %vm643, %v18, 0
  %vm647 = vcmask 1041408
  %v649 = vsel %vm647, %v531, 0
  %v652 = vsel %vm647, %v532, 0
  %v655 = vsel %vm647, %v533, 0
  %v658 = vsel %vm647, %v534, 0
  %v661 = vsel %vm647, %v535, 0
  %v664 = vsel %vm647, %v536, 0
  %v667 = vsel %vm647, %v537, 0
  %v670 = vsel %vm647, %v538, 0
  %v673 = vsel %vm647, %v539, 0
  %v676 = vsel %vm647, %v540, 0
  %v679 = vsel %vm647, %v541, 0
  %v682 = vsel %vm647, %v542, 0
  %v685 = vsel %vm647, %v543, 0
  %v688 = vsel %vm647, %v544, 0
  %v691 = vsel %vm647, %v545, 0
  %v694 = vsel %vm647, %v546, 0
  %696 = vmatprep.subr.bf16.mxu0 0
  %697 = vmatpush1.bf16.msra.mxu0 0
  %698 = vmatprep.subr.bf16.mxu0 %v652
  %699 = vmatpush1.bf16.msra.mxu0 %v649
  %700 = vmatprep.subr.bf16.mxu0 %v516
  %701 = vmatpush1.bf16.msra.mxu0 %v515
  %702 = vmatprep.subr.bf16.mxu0 %v500
  %703 = vmatpush1.bf16.msra.mxu0 %v499
  %704 = vmatprep.subr.bf16.mxu0 %v484
  %705 = vmatpush1.bf16.msra.mxu0 %v483
  %706 = vmatprep.subr.bf16.mxu0 %v468
  %707 = vmatpush1.bf16.msra.mxu0 %v467
  %708 = vmatprep.subr.bf16.mxu0 %v452
  %709 = vmatpush1.bf16.msra.mxu0 %v451
  %710 = vmatprep.subr.bf16.mxu0 %v436
  %711 = vmatpush1.bf16.msra.mxu0 %v435
  %712 = vmatprep.subr.bf16.mxu0 0
  %713 = vmatpush2.bf16.msra.mxu0 0
  %714 = vmatprep.subr.bf16.mxu0 0
  %715 = vmatpush2.bf16.msra.mxu0 0
  %716 = vmatprep.subr.bf16.mxu0 0
  %717 = vmatpush2.bf16.msra.mxu0 0
  %718 = vmatprep.subr.bf16.mxu0 0
  %719 = vmatpush2.bf16.msra.mxu0 0
  %720 = vmatprep.subr.bf16.mxu0 0
  %721 = vmatpush2.bf16.msra.mxu0 0
  %722 = vmatprep.subr.bf16.mxu0 0
  %723 = vmatpush2.bf16.msra.mxu0 0
  %724 = vmatprep.subr.bf16.mxu0 0
  %725 = vmatpush2.bf16.msra.mxu0 0
  %726 = vmatprep.subr.bf16.mxu0 0
  %727 = vmatpush2.bf16.msra.mxu0 0
  %728 = vmatprep.mubr.bf16.mxu0 0
  %729 = vmatmul.mubr.bf16.gmra.mxu0 %v645
  %v730 = vpop.f32.mrf.mxu0
  %v731 = vadd.f32 0.0, %v730
  %v732 = vpop.f32.mrf.mxu0
  %v733 = vadd.f32 0.0, %v732
  %v734 = vpop.f32.mrf.mxu0
  %v735 = vpop.f32.mrf.mxu0
  %736 = vdwg.mxu0
  %737 = vmatprep.subr.bf16.mxu0 0
  %738 = vmatpush1.bf16.msra.mxu0 0
  %739 = vmatprep.subr.bf16.mxu0 %v658
  %740 = vmatpush1.bf16.msra.mxu0 %v655
  %741 = vmatprep.subr.bf16.mxu0 %v518
  %742 = vmatpush1.bf16.msra.mxu0 %v517
  %743 = vmatprep.subr.bf16.mxu0 %v502
  %744 = vmatpush1.bf16.msra.mxu0 %v501
  %745 = vmatprep.subr.bf16.mxu0 %v486
  %746 = vmatpush1.bf16.msra.mxu0 %v485
  %747 = vmatprep.subr.bf16.mxu0 %v470
  %748 = vmatpush1.bf16.msra.mxu0 %v469
  %749 = vmatprep.subr.bf16.mxu0 %v454
  %750 = vmatpush1.bf16.msra.mxu0 %v453
  %751 = vmatprep.subr.bf16.mxu0 %v438
  %752 = vmatpush1.bf16.msra.mxu0 %v437
  %753 = vmatprep.subr.bf16.mxu0 0
  %754 = vmatpush2.bf16.msra.mxu0 0
  %755 = vmatprep.subr.bf16.mxu0 0
  %756 = vmatpush2.bf16.msra.mxu0 0
  %757 = vmatprep.subr.bf16.mxu0 0
  %758 = vmatpush2.bf16.msra.mxu0 0
  %759 = vmatprep.subr.bf16.mxu0 0
  %760 = vmatpush2.bf16.msra.mxu0 0
  %761 = vmatprep.subr.bf16.mxu0 0
  %762 = vmatpush2.bf16.msra.mxu0 0
  %763 = vmatprep.subr.bf16.mxu0 0
  %764 = vmatpush2.bf16.msra.mxu0 0
  %765 = vmatprep.subr.bf16.mxu0 0
  %766 = vmatpush2.bf16.msra.mxu0 0
  %767 = vmatprep.subr.bf16.mxu0 0
  %768 = vmatpush2.bf16.msra.mxu0 0
  %769 = vmatprep.mubr.bf16.mxu0 0
  %770 = vmatmul.mubr.bf16.gmra.mxu0 %v645
  %v771 = vpop.f32.mrf.mxu0
  %v772 = vadd.f32 0.0, %v771
  %v773 = vpop.f32.mrf.mxu0
  %v774 = vadd.f32 0.0, %v773
  %v775 = vpop.f32.mrf.mxu0
  %v776 = vpop.f32.mrf.mxu0
  %777 = vdwg.mxu0
  %778 = vmatprep.subr.bf16.mxu0 0
  %779 = vmatpush1.bf16.msra.mxu0 0
  %780 = vmatprep.subr.bf16.mxu0 %v664
  %781 = vmatpush1.bf16.msra.mxu0 %v661
  %782 = vmatprep.subr.bf16.mxu0 %v520
  %783 = vmatpush1.bf16.msra.mxu0 %v519
  %784 = vmatprep.subr.bf16.mxu0 %v504
  %785 = vmatpush1.bf16.msra.mxu0 %v503
  %786 = vmatprep.subr.bf16.mxu0 %v488
  %787 = vmatpush1.bf16.msra.mxu0 %v487
  %788 = vmatprep.subr.bf16.mxu0 %v472
  %789 = vmatpush1.bf16.msra.mxu0 %v471
  %790 = vmatprep.subr.bf16.mxu0 %v456
  %791 = vmatpush1.bf16.msra.mxu0 %v455
  %792 = vmatprep.subr.bf16.mxu0 %v440
  %793 = vmatpush1.bf16.msra.mxu0 %v439
  %794 = vmatprep.subr.bf16.mxu0 0
  %795 = vmatpush2.bf16.msra.mxu0 0
  %796 = vmatprep.subr.bf16.mxu0 0
  %797 = vmatpush2.bf16.msra.mxu0 0
  %798 = vmatprep.subr.bf16.mxu0 0
  %799 = vmatpush2.bf16.msra.mxu0 0
  %800 = vmatprep.subr.bf16.mxu0 0
  %801 = vmatpush2.bf16.msra.mxu0 0
  %802 = vmatprep.subr.bf16.mxu0 0
  %803 = vmatpush2.bf16.msra.mxu0 0
  %804 = vmatprep.subr.bf16.mxu0 0
  %805 = vmatpush2.bf16.msra.mxu0 0
  %806 = vmatprep.subr.bf16.mxu0 0
  %807 = vmatpush2.bf16.msra.mxu0 0
  %808 = vmatprep.subr.bf16.mxu0 0
  %809 = vmatpush2.bf16.msra.mxu0 0
  %810 = vmatprep.mubr.bf16.mxu0 0
  %811 = vmatmul.mubr.bf16.gmra.mxu0 %v645
  %v812 = vpop.f32.mrf.mxu0
  %v813 = vadd.f32 0.0, %v812
  %v814 = vpop.f32.mrf.mxu0
  %v815 = vadd.f32 0.0, %v814
  %v816 = vpop.f32.mrf.mxu0
  %v817 = vpop.f32.mrf.mxu0
  %818 = vdwg.mxu0
  %819 = vmatprep.subr.bf16.mxu0 0
  %820 = vmatpush1.bf16.msra.mxu0 0
  %821 = vmatprep.subr.bf16.mxu0 %v670
  %822 = vmatpush1.bf16.msra.mxu0 %v667
  %823 = vmatprep.subr.bf16.mxu0 %v522
  %824 = vmatpush1.bf16.msra.mxu0 %v521
  %825 = vmatprep.subr.bf16.mxu0 %v506
  %826 = vmatpush1.bf16.msra.mxu0 %v505
  %827 = vmatprep.subr.bf16.mxu0 %v490
  %828 = vmatpush1.bf16.msra.mxu0 %v489
  %829 = vmatprep.subr.bf16.mxu0 %v474
  %830 = vmatpush1.bf16.msra.mxu0 %v473
  %831 = vmatprep.subr.bf16.mxu0 %v458
  %832 = vmatpush1.bf16.msra.mxu0 %v457
  %833 = vmatprep.subr.bf16.mxu0 %v442
  %834 = vmatpush1.bf16.msra.mxu0 %v441
  %835 = vmatprep.subr.bf16.mxu0 0
  %836 = vmatpush2.bf16.msra.mxu0 0
  %837 = vmatprep.subr.bf16.mxu0 0
  %838 = vmatpush2.bf16.msra.mxu0 0
  %839 = vmatprep.subr.bf16.mxu0 0
  %840 = vmatpush2.bf16.msra.mxu0 0
  %841 = vmatprep.subr.bf16.mxu0 0
  %842 = vmatpush2.bf16.msra.mxu0 0
  %843 = vmatprep.subr.bf16.mxu0 0
  %844 = vmatpush2.bf16.msra.mxu0 0
  %845 = vmatprep.subr.bf16.mxu0 0
  %846 = vmatpush2.bf16.msra.mxu0 0
  %847 = vmatprep.subr.bf16.mxu0 0
  %848 = vmatpush2.bf16.msra.mxu0 0
  %849 = vmatprep.subr.bf16.mxu0 0
  %850 = vmatpush2.bf16.msra.mxu0 0
  %851 = vmatprep.mubr.bf16.mxu0 0
  %852 = vmatmul.mubr.bf16.gmra.mxu0 %v645
  %v853 = vpop.f32.mrf.mxu0
  %v854 = vadd.f32 0.0, %v853
  %v855 = vpop.f32.mrf.mxu0
  %v856 = vadd.f32 0.0, %v855
  %v857 = vpop.f32.mrf.mxu0
  %v858 = vpop.f32.mrf.mxu0
  %859 = vdwg.mxu0
  %860 = vmatprep.subr.bf16.mxu0 0
  %861 = vmatpush1.bf16.msra.mxu0 0
  %862 = vmatprep.subr.bf16.mxu0 %v676
  %863 = vmatpush1.bf16.msra.mxu0 %v673
  %864 = vmatprep.subr.bf16.mxu0 %v524
  %865 = vmatpush1.bf16.msra.mxu0 %v523
  %866 = vmatprep.subr.bf16.mxu0 %v508
  %867 = vmatpush1.bf16.msra.mxu0 %v507
  %868 = vmatprep.subr.bf16.mxu0 %v492
  %869 = vmatpush1.bf16.msra.mxu0 %v491
  %870 = vmatprep.subr.bf16.mxu0 %v476
  %871 = vmatpush1.bf16.msra.mxu0 %v475
  %872 = vmatprep.subr.bf16.mxu0 %v460
  %873 = vmatpush1.bf16.msra.mxu0 %v459
  %874 = vmatprep.subr.bf16.mxu0 %v444
  %875 = vmatpush1.bf16.msra.mxu0 %v443
  %876 = vmatprep.subr.bf16.mxu0 0
  %877 = vmatpush2.bf16.msra.mxu0 0
  %878 = vmatprep.subr.bf16.mxu0 0
  %879 = vmatpush2.bf16.msra.mxu0 0
  %880 = vmatprep.subr.bf16.mxu0 0
  %881 = vmatpush2.bf16.msra.mxu0 0
  %882 = vmatprep.subr.bf16.mxu0 0
  %883 = vmatpush2.bf16.msra.mxu0 0
  %884 = vmatprep.subr.bf16.mxu0 0
  %885 = vmatpush2.bf16.msra.mxu0 0
  %886 = vmatprep.subr.bf16.mxu0 0
  %887 = vmatpush2.bf16.msra.mxu0 0
  %888 = vmatprep.subr.bf16.mxu0 0
  %889 = vmatpush2.bf16.msra.mxu0 0
  %890 = vmatprep.subr.bf16.mxu0 0
  %891 = vmatpush2.bf16.msra.mxu0 0
  %892 = vmatprep.mubr.bf16.mxu0 0
  %893 = vmatmul.mubr.bf16.gmra.mxu0 %v645
  %v894 = vpop.f32.mrf.mxu0
  %v895 = vadd.f32 0.0, %v894
  %v896 = vpop.f32.mrf.mxu0
  %v897 = vadd.f32 0.0, %v896
  %v898 = vpop.f32.mrf.mxu0
  %v899 = vpop.f32.mrf.mxu0
  %900 = vdwg.mxu0
  %901 = vmatprep.subr.bf16.mxu0 0
  %902 = vmatpush1.bf16.msra.mxu0 0
  %903 = vmatprep.subr.bf16.mxu0 %v682
  %904 = vmatpush1.bf16.msra.mxu0 %v679
  %905 = vmatprep.subr.bf16.mxu0 %v526
  %906 = vmatpush1.bf16.msra.mxu0 %v525
  %907 = vmatprep.subr.bf16.mxu0 %v510
  %908 = vmatpush1.bf16.msra.mxu0 %v509
  %909 = vmatprep.subr.bf16.mxu0 %v494
  %910 = vmatpush1.bf16.msra.mxu0 %v493
  %911 = vmatprep.subr.bf16.mxu0 %v478
  %912 = vmatpush1.bf16.msra.mxu0 %v477
  %913 = vmatprep.subr.bf16.mxu0 %v462
  %914 = vmatpush1.bf16.msra.mxu0 %v461
  %915 = vmatprep.subr.bf16.mxu0 %v446
  %916 = vmatpush1.bf16.msra.mxu0 %v445
  %917 = vmatprep.subr.bf16.mxu0 0
  %918 = vmatpush2.bf16.msra.mxu0 0
  %919 = vmatprep.subr.bf16.mxu0 0
  %920 = vmatpush2.bf16.msra.mxu0 0
  %921 = vmatprep.subr.bf16.mxu0 0
  %922 = vmatpush2.bf16.msra.mxu0 0
  %923 = vmatprep.subr.bf16.mxu0 0
  %924 = vmatpush2.bf16.msra.mxu0 0
  %925 = vmatprep.subr.bf16.mxu0 0
  %926 = vmatpush2.bf16.msra.mxu0 0
  %927 = vmatprep.subr.bf16.mxu0 0
  %928 = vmatpush2.bf16.msra.mxu0 0
  %929 = vmatprep.subr.bf16.mxu0 0
  %930 = vmatpush2.bf16.msra.mxu0 0
  %931 = vmatprep.subr.bf16.mxu0 0
  %932 = vmatpush2.bf16.msra.mxu0 0
  %933 = vmatprep.mubr.bf16.mxu0 0
  %934 = vmatmul.mubr.bf16.gmra.mxu0 %v645
  %v935 = vpop.f32.mrf.mxu0
  %v936 = vadd.f32 0.0, %v935
  %v937 = vpop.f32.mrf.mxu0
  %v938 = vadd.f32 0.0, %v937
  %v939 = vpop.f32.mrf.mxu0
  %v940 = vpop.f32.mrf.mxu0
  %941 = vdwg.mxu0
  %942 = vmatprep.subr.bf16.mxu0 0
  %943 = vmatpush1.bf16.msra.mxu0 0
  %944 = vmatprep.subr.bf16.mxu0 %v688
  %945 = vmatpush1.bf16.msra.mxu0 %v685
  %946 = vmatprep.subr.bf16.mxu0 %v528
  %947 = vmatpush1.bf16.msra.mxu0 %v527
  %948 = vmatprep.subr.bf16.mxu0 %v512
  %949 = vmatpush1.bf16.msra.mxu0 %v511
  %950 = vmatprep.subr.bf16.mxu0 %v496
  %951 = vmatpush1.bf16.msra.mxu0 %v495
  %952 = vmatprep.subr.bf16.mxu0 %v480
  %953 = vmatpush1.bf16.msra.mxu0 %v479
  %954 = vmatprep.subr.bf16.mxu0 %v464
  %955 = vmatpush1.bf16.msra.mxu0 %v463
  %956 = vmatprep.subr.bf16.mxu0 %v448
  %957 = vmatpush1.bf16.msra.mxu0 %v447
  %958 = vmatprep.subr.bf16.mxu0 0
  %959 = vmatpush2.bf16.msra.mxu0 0
  %960 = vmatprep.subr.bf16.mxu0 0
  %961 = vmatpush2.bf16.msra.mxu0 0
  %962 = vmatprep.subr.bf16.mxu0 0
  %963 = vmatpush2.bf16.msra.mxu0 0
  %964 = vmatprep.subr.bf16.mxu0 0
  %965 = vmatpush2.bf16.msra.mxu0 0
  %966 = vmatprep.subr.bf16.mxu0 0
  %967 = vmatpush2.bf16.msra.mxu0 0
  %968 = vmatprep.subr.bf16.mxu0 0
  %969 = vmatpush2.bf16.msra.mxu0 0
  %970 = vmatprep.subr.bf16.mxu0 0
  %971 = vmatpush2.bf16.msra.mxu0 0
  %972 = vmatprep.subr.bf16.mxu0 0
  %973 = vmatpush2.bf16.msra.mxu0 0
  %974 = vmatprep.mubr.bf16.mxu0 0
  %975 = vmatmul.mubr.bf16.gmra.mxu0 %v645
  %v976 = vpop.f32.mrf.mxu0
  %v977 = vadd.f32 0.0, %v976
  %v978 = vpop.f32.mrf.mxu0
  %v979 = vadd.f32 0.0, %v978
  %v980 = vpop.f32.mrf.mxu0
  %v981 = vpop.f32.mrf.mxu0
  %982 = vdwg.mxu0
  %983 = vmatprep.subr.bf16.mxu0 0
  %984 = vmatpush1.bf16.msra.mxu0 0
  %985 = vmatprep.subr.bf16.mxu0 %v694
  %986 = vmatpush1.bf16.msra.mxu0 %v691
  %987 = vmatprep.subr.bf16.mxu0 %v530
  %988 = vmatpush1.bf16.msra.mxu0 %v529
  %989 = vmatprep.subr.bf16.mxu0 %v514
  %990 = vmatpush1.bf16.msra.mxu0 %v513
  %991 = vmatprep.subr.bf16.mxu0 %v498
  %992 = vmatpush1.bf16.msra.mxu0 %v497
  %993 = vmatprep.subr.bf16.mxu0 %v482
  %994 = vmatpush1.bf16.msra.mxu0 %v481
  %995 = vmatprep.subr.bf16.mxu0 %v466
  %996 = vmatpush1.bf16.msra.mxu0 %v465
  %997 = vmatprep.subr.bf16.mxu0 %v450
  %998 = vmatpush1.bf16.msra.mxu0 %v449
  %999 = vmatprep.subr.bf16.mxu0 0
  %1000 = vmatpush2.bf16.msra.mxu0 0
  %1001 = vmatprep.subr.bf16.mxu0 0
  %1002 = vmatpush2.bf16.msra.mxu0 0
  %1003 = vmatprep.subr.bf16.mxu0 0
  %1004 = vmatpush2.bf16.msra.mxu0 0
  %1005 = vmatprep.subr.bf16.mxu0 0
  %1006 = vmatpush2.bf16.msra.mxu0 0
  %1007 = vmatprep.subr.bf16.mxu0 0
  %1008 = vmatpush2.bf16.msra.mxu0 0
  %1009 = vmatprep.subr.bf16.mxu0 0
  %1010 = vmatpush2.bf16.msra.mxu0 0
  %1011 = vmatprep.subr.bf16.mxu0 0
  %1012 = vmatpush2.bf16.msra.mxu0 0
  %1013 = vmatprep.subr.bf16.mxu0 0
  %1014 = vmatpush2.bf16.msra.mxu0 0
  %1015 = vmatprep.mubr.bf16.mxu0 0
  %1016 = vmatmul.mubr.bf16.gmra.mxu0 %v645
  %v1017 = vpop.f32.mrf.mxu0
  %v1018 = vadd.f32 0.0, %v1017
  %v1019 = vpop.f32.mrf.mxu0
  %v1020 = vadd.f32 0.0, %v1019
  %v1021 = vpop.f32.mrf.mxu0
  %v1022 = vpop.f32.mrf.mxu0
  %1023 = vdwg.mxu0
  %v1024 = vadd.f32 %v731, %v733
  %v1025 = vadd.f32 %v1024, %v772
  %v1026 = vadd.f32 %v1025, %v774
  %v1027 = vadd.f32 %v1026, %v813
  %v1028 = vadd.f32 %v1027, %v815
  %v1029 = vadd.f32 %v1028, %v854
  %v1030 = vadd.f32 %v1029, %v856
  %v1031 = vadd.f32 %v1030, %v895
  %v1032 = vadd.f32 %v1031, %v897
  %v1033 = vadd.f32 %v1032, %v936
  %v1034 = vadd.f32 %v1033, %v938
  %v1035 = vadd.f32 %v1034, %v977
  %v1036 = vadd.f32 %v1035, %v979
  %v1037 = vadd.f32 %v1036, %v1018
  %v1038 = vadd.f32 %v1037, %v1020
  %1039 = vadd.xlane.f32.xlu0 %v1038
  %v1040 = vpop.xlane.xlu0 %1039
  %v1041 = vmul.f32 %v1040, 0.00048828125
  %v1042 = vsub.f32 %v731, %v1041
  %v1043 = vsub.f32 %v733, %v1041
  %v1044 = vsub.f32 %v772, %v1041
  %v1045 = vsub.f32 %v774, %v1041
  %v1046 = vsub.f32 %v813, %v1041
  %v1047 = vsub.f32 %v815, %v1041
  %v1048 = vsub.f32 %v854, %v1041
  %v1049 = vsub.f32 %v856, %v1041
  %v1050 = vsub.f32 %v895, %v1041
  %v1051 = vsub.f32 %v897, %v1041
  %v1052 = vsub.f32 %v936, %v1041
  %v1053 = vsub.f32 %v938, %v1041
  %v1054 = vsub.f32 %v977, %v1041
  %v1055 = vsub.f32 %v979, %v1041
  %v1056 = vsub.f32 %v1018, %v1041
  %v1057 = vsub.f32 %v1020, %v1041
  %v1058 = vmul.f32 %v1042, %v1042
  %v1059 = vmul.f32 %v1043, %v1043
  %v1060 = vmul.f32 %v1044, %v1044
  %v1061 = vmul.f32 %v1045, %v1045
  %v1062 = vmul.f32 %v1046, %v1046
  %v1063 = vmul.f32 %v1047, %v1047
  %v1064 = vmul.f32 %v1048, %v1048
  %v1065 = vmul.f32 %v1049, %v1049
  %v1066 = vmul.f32 %v1050, %v1050
  %v1067 = vmul.f32 %v1051, %v1051
  %v1068 = vmul.f32 %v1052, %v1052
  %v1069 = vmul.f32 %v1053, %v1053
  %v1070 = vmul.f32 %v1054, %v1054
  %v1071 = vmul.f32 %v1055, %v1055
  %v1072 = vmul.f32 %v1056, %v1056
  %v1073 = vmul.f32 %v1057, %v1057
  %v1074 = vadd.f32 %v1058, %v1059
  %v1075 = vadd.f32 %v1074, %v1060
  %v1076 = vadd.f32 %v1075, %v1061
  %v1077 = vadd.f32 %v1076, %v1062
  %v1078 = vadd.f32 %v1077, %v1063
  %v1079 = vadd.f32 %v1078, %v1064
  %v1080 = vadd.f32 %v1079, %v1065
  %v1081 = vadd.f32 %v1080, %v1066
  %v1082 = vadd.f32 %v1081, %v1067
  %v1083 = vadd.f32 %v1082, %v1068
  %v1084 = vadd.f32 %v1083, %v1069
  %v1085 = vadd.f32 %v1084, %v1070
  %v1086 = vadd.f32 %v1085, %v1071
  %v1087 = vadd.f32 %v1086, %v1072
  %v1088 = vadd.f32 %v1087, %v1073
  %1089 = vadd.xlane.f32.xlu0 %v1088
  %v1090 = vpop.xlane.xlu0 %1089
  %v1091 = vmul.f32 %v1090, 0.00048828125
  %v1092 = vadd.f32 %v1091, 1e-05
  %v1093 = vrsqrt.pop %v1092
  %v1094 = vmul.f32 %v1042, %v1093
  %v1095 = vmul.f32 %v1043, %v1093
  %v1096 = vmul.f32 %v1044, %v1093
  %v1097 = vmul.f32 %v1045, %v1093
  %v1098 = vmul.f32 %v1046, %v1093
  %v1099 = vmul.f32 %v1047, %v1093
  %v1100 = vmul.f32 %v1048, %v1093
  %v1101 = vmul.f32 %v1049, %v1093
  %v1102 = vmul.f32 %v1050, %v1093
  %v1103 = vmul.f32 %v1051, %v1093
  %v1104 = vmul.f32 %v1052, %v1093
  %v1105 = vmul.f32 %v1053, %v1093
  %v1106 = vmul.f32 %v1054, %v1093
  %v1107 = vmul.f32 %v1055, %v1093
  %v1108 = vmul.f32 %v1056, %v1093
  %v1109 = vmul.f32 %v1057, %v1093
  %v1110 = vld [vmem:[%s2] sm:$0xff]
  %1112 = vset.pattern.permute.xlu0 0
  %1113 = vperm.xlu0 %1112, %v1110
  %v1114 = vpop.permute.xlu0 %1113
  %v1116 = vmul.f32 %v1094, %v1114
  %v1117 = vmul.f32 %v1095, %v1114
  %v1118 = vmul.f32 %v1096, %v1114
  %v1119 = vmul.f32 %v1097, %v1114
  %v1120 = vmul.f32 %v1098, %v1114
  %v1121 = vmul.f32 %v1099, %v1114
  %v1122 = vmul.f32 %v1100, %v1114
  %v1123 = vmul.f32 %v1101, %v1114
  %v1124 = vmul.f32 %v1102, %v1114
  %v1125 = vmul.f32 %v1103, %v1114
  %v1126 = vmul.f32 %v1104, %v1114
  %v1127 = vmul.f32 %v1105, %v1114
  %v1128 = vmul.f32 %v1106, %v1114
  %v1129 = vmul.f32 %v1107, %v1114
  %v1130 = vmul.f32 %v1108, %v1114
  %v1131 = vmul.f32 %v1109, %v1114
  %v1132 = vld [vmem:[%s3] sm:$0xff]
  %1134 = vset.pattern.permute.xlu0 0
  %1135 = vperm.xlu0 %1134, %v1132
  %v1136 = vpop.permute.xlu0 %1135
  %v1138 = vadd.f32 %v1116, %v1136
  %v1139 = vadd.f32 %v1117, %v1136
  %v1140 = vadd.f32 %v1118, %v1136
  %v1141 = vadd.f32 %v1119, %v1136
  %v1142 = vadd.f32 %v1120, %v1136
  %v1143 = vadd.f32 %v1121, %v1136
  %v1144 = vadd.f32 %v1122, %v1136
  %v1145 = vadd.f32 %v1123, %v1136
  %v1146 = vadd.f32 %v1124, %v1136
  %v1147 = vadd.f32 %v1125, %v1136
  %v1148 = vadd.f32 %v1126, %v1136
  %v1149 = vadd.f32 %v1127, %v1136
  %v1150 = vadd.f32 %v1128, %v1136
  %v1151 = vadd.f32 %v1129, %v1136
  %v1152 = vadd.f32 %v1130, %v1136
  %v1153 = vadd.f32 %v1131, %v1136
  %v1154 = vmax.f32 %v1138, 0.0
  %v1155 = vmax.f32 %v1139, 0.0
  %v1156 = vmax.f32 %v1140, 0.0
  %v1157 = vmax.f32 %v1141, 0.0
  %v1158 = vmax.f32 %v1142, 0.0
  %v1159 = vmax.f32 %v1143, 0.0
  %v1160 = vmax.f32 %v1144, 0.0
  %v1161 = vmax.f32 %v1145, 0.0
  %v1162 = vmax.f32 %v1146, 0.0
  %v1163 = vmax.f32 %v1147, 0.0
  %v1164 = vmax.f32 %v1148, 0.0
  %v1165 = vmax.f32 %v1149, 0.0
  %v1166 = vmax.f32 %v1150, 0.0
  %v1167 = vmax.f32 %v1151, 0.0
  %v1168 = vmax.f32 %v1152, 0.0
  %v1169 = vmax.f32 %v1153, 0.0
  %v1170 = vpack.c.bf16 %v1154, %v1154
  %v1171 = vpack.c.bf16 %v1155, %v1155
  %v1172 = vpack.c.bf16 %v1156, %v1156
  %v1173 = vpack.c.bf16 %v1157, %v1157
  %v1174 = vpack.c.bf16 %v1158, %v1158
  %v1175 = vpack.c.bf16 %v1159, %v1159
  %v1176 = vpack.c.bf16 %v1160, %v1160
  %v1177 = vpack.c.bf16 %v1161, %v1161
  %v1178 = vpack.c.bf16 %v1162, %v1162
  %v1179 = vpack.c.bf16 %v1163, %v1163
  %v1180 = vpack.c.bf16 %v1164, %v1164
  %v1181 = vpack.c.bf16 %v1165, %v1165
  %v1182 = vpack.c.bf16 %v1166, %v1166
  %v1183 = vpack.c.bf16 %v1167, %v1167
  %v1184 = vpack.c.bf16 %v1168, %v1168
  %v1185 = vpack.c.bf16 %v1169, %v1169
  %v1202 = vunpack.c.l.b16 %v1170
  %v1203 = vunpack.c.l.b16 %v1171
  %v1204 = vunpack.c.l.b16 %v1172
  %v1205 = vunpack.c.l.b16 %v1173
  %v1206 = vunpack.c.l.b16 %v1174
  %v1207 = vunpack.c.l.b16 %v1175
  %v1208 = vunpack.c.l.b16 %v1176
  %v1209 = vunpack.c.l.b16 %v1177
  %v1210 = vunpack.c.l.b16 %v1178
  %v1211 = vunpack.c.l.b16 %v1179
  %v1212 = vunpack.c.l.b16 %v1180
  %v1213 = vunpack.c.l.b16 %v1181
  %v1214 = vunpack.c.l.b16 %v1182
  %v1215 = vunpack.c.l.b16 %v1183
  %v1216 = vunpack.c.l.b16 %v1184
  %v1217 = vunpack.c.l.b16 %v1185
  %v1218 = vpack.c.b16 %v1203, %v1202
  %v1219 = vpack.c.b16 %v1205, %v1204
  %v1220 = vpack.c.b16 %v1207, %v1206
  %v1221 = vpack.c.b16 %v1209, %v1208
  %v1222 = vpack.c.b16 %v1211, %v1210
  %v1223 = vpack.c.b16 %v1213, %v1212
  %v1224 = vpack.c.b16 %v1215, %v1214
  %v1225 = vpack.c.b16 %v1217, %v1216
  %1234 = vst [vmem:[%s4] sm:$0xff] %v1218
  %1235 = vst [vmem:[%s4 + $0x8] sm:$0xff] %v1219
  %1236 = vst [vmem:[%s4 + $0x10] sm:$0xff] %v1220
  %1237 = vst [vmem:[%s4 + $0x18] sm:$0xff] %v1221
  %1238 = vst [vmem:[%s4 + $0x20] sm:$0xff] %v1222
  %1239 = vst [vmem:[%s4 + $0x28] sm:$0xff] %v1223
  %1240 = vst [vmem:[%s4 + $0x30] sm:$0xff] %v1224
  %1241 = vst [vmem:[%s4 + $0x38] sm:$0xff] %v1225
  // Predicated region
  $region18: #{upsample_block.2} parent=0 // pred_check
    _
  $region19: #{upsample_block.2} parent=0 // pred_check_branch
    %1243 = sbr.rel (0) target = $region21
  $region20: #{upsample_block.2} parent=0 // pred_region
    _
  $region21: #{upsample_block.2} parent=0 // pred_fallthru
    _
  // Predicated region
  $region22: #{upsample_block.2} parent=0 // pred_check
    _
  $region23: #{upsample_block.2} parent=0 // pred_check_branch
    %1245 = sbr.rel (0) target = $region25
  $region24: #{upsample_block.2} parent=0 // pred_region
    _
  $region25: #{upsample_block.2} parent=0 // pred_fallthru
    _

// kernel: upsample_block.3
$region0: #{upsample_block.3}
  #allocation0 [shape = 'u32[]', space=smem, size = 0x4, offset = 0x4, fixed_abs, tag = 'smem constant byte address 0x4 - core index']
  #allocation1 [shape = 'u32[144,128]{1,0:T(1,128)}', space=vmem, size = 0x12000, scoped, tag = 'internal scratch']
  %s0 = inlined_call_operand.vmem [shape: bf16[72,2048], index: 0, kind: input, shape index: {}]
  %s1 = inlined_call_operand.vmem [shape: bf16[8,72], index: 1, kind: input, shape index: {}]
  %s2 = inlined_call_operand.vmem [shape: f32[8,1], index: 2, kind: input, shape index: {}]
  %s3 = inlined_call_operand.vmem [shape: f32[8,1], index: 3, kind: input, shape index: {}]
  %s4 = inlined_call_operand.vmem [shape: bf16[4,2048], index: 4, kind: input, shape index: {}]
  %s5 = inlined_call_operand.vmem [shape: bf16[8,4], index: 5, kind: input, shape index: {}]
  %s6 = inlined_call_operand.vmem [shape: f32[8,1], index: 6, kind: input, shape index: {}]
  %s7 = inlined_call_operand.vmem [shape: f32[8,1], index: 7, kind: input, shape index: {}]
  %s8 = inlined_call_operand.vmem [shape: f32[8,2048], index: 8, kind: output, shape index: {}]
  %s9 = sld [smem:[#allocation0]]
  $region42: #{upsample_block.3} parent=0
    _
  %s11 = ssub.s32 1, %s9
  %s12 = scalar_select 0, %s11, %s9
  // Predicated region
  $region2: #{upsample_block.3} parent=0 // pred_check
    _
  $region3: #{upsample_block.3} parent=0 // pred_check_branch
    %14 = sbr.rel (0) target = $region5
  $region4: #{upsample_block.3} parent=0 // pred_region
    _
  $region5: #{upsample_block.3} parent=0 // pred_fallthru
    _
  // Predicated region
  $region6: #{upsample_block.3} parent=0 // pred_check
    _
  $region7: #{upsample_block.3} parent=0 // pred_check_branch
    %16 = sbr.rel (0) target = $region9
  $region8: #{upsample_block.3} parent=0 // pred_region
    _
  $region9: #{upsample_block.3} parent=0 // pred_fallthru
    _
  // Predicated region
  $region10: #{upsample_block.3} parent=0 // pred_check
    _
  $region11: #{upsample_block.3} parent=0 // pred_check_branch
    %18 = sbr.rel (0) target = $region13
  $region12: #{upsample_block.3} parent=0 // pred_region
    _
  $region13: #{upsample_block.3} parent=0 // pred_fallthru
    _
  // Predicated region
  $region14: #{upsample_block.3} parent=0 // pred_check
    _
  $region15: #{upsample_block.3} parent=0 // pred_check_branch
    %20 = sbr.rel (0) target = $region17
  $region16: #{upsample_block.3} parent=0 // pred_region
    _
  $region17: #{upsample_block.3} parent=0 // pred_fallthru
    _
  // Predicated region
  $region18: #{upsample_block.3} parent=0 // pred_check
    _
  $region19: #{upsample_block.3} parent=0 // pred_check_branch
    %22 = sbr.rel (0) target = $region21
  $region20: #{upsample_block.3} parent=0 // pred_region
    _
  $region21: #{upsample_block.3} parent=0 // pred_fallthru
    _
  // Predicated region
  $region22: #{upsample_block.3} parent=0 // pred_check
    _
  $region23: #{upsample_block.3} parent=0 // pred_check_branch
    %24 = sbr.rel (0) target = $region25
  $region24: #{upsample_block.3} parent=0 // pred_region
    _
  $region25: #{upsample_block.3} parent=0 // pred_fallthru
    _
  // Predicated region
  $region26: #{upsample_block.3} parent=0 // pred_check
    _
  $region27: #{upsample_block.3} parent=0 // pred_check_branch
    %26 = sbr.rel (0) target = $region29
  $region28: #{upsample_block.3} parent=0 // pred_region
    _
  $region29: #{upsample_block.3} parent=0 // pred_fallthru
    _
  // Predicated region
  $region30: #{upsample_block.3} parent=0 // pred_check
    _
  $region31: #{upsample_block.3} parent=0 // pred_check_branch
    %28 = sbr.rel (0) target = $region33
  $region32: #{upsample_block.3} parent=0 // pred_region
    _
  $region33: #{upsample_block.3} parent=0 // pred_fallthru
    _
  %v30 = vld [vmem:[%s1] sm:$0xf]
  %v31 = vld [vmem:[%s0] sm:$0xff]
  %v32 = vld [vmem:[%s0 + $0x8] sm:$0xff]
  %v33 = vld [vmem:[%s0 + $0x10] sm:$0xff]
  %v34 = vld [vmem:[%s0 + $0x18] sm:$0xff]
  %v35 = vld [vmem:[%s0 + $0x20] sm:$0xff]
  %v36 = vld [vmem:[%s0 + $0x28] sm:$0xff]
  %v37 = vld [vmem:[%s0 + $0x30] sm:$0xff]
  %v38 = vld [vmem:[%s0 + $0x38] sm:$0xff]
  %v39 = vld [vmem:[%s0 + $0x40] sm:$0xff]
  %v40 = vld [vmem:[%s0 + $0x48] sm:$0xff]
  %v41 = vld [vmem:[%s0 + $0x50] sm:$0xff]
  %v42 = vld [vmem:[%s0 + $0x58] sm:$0xff]
  %v43 = vld [vmem:[%s0 + $0x60] sm:$0xff]
  %v44 = vld [vmem:[%s0 + $0x68] sm:$0xff]
  %v45 = vld [vmem:[%s0 + $0x70] sm:$0xff]
  %v46 = vld [vmem:[%s0 + $0x78] sm:$0xff]
  %v47 = vld [vmem:[%s0 + $0x80] sm:$0xff]
  %v48 = vld [vmem:[%s0 + $0x88] sm:$0xff]
  %v49 = vld [vmem:[%s0 + $0x90] sm:$0xff]
  %v50 = vld [vmem:[%s0 + $0x98] sm:$0xff]
  %v51 = vld [vmem:[%s0 + $0xa0] sm:$0xff]
  %v52 = vld [vmem:[%s0 + $0xa8] sm:$0xff]
  %v53 = vld [vmem:[%s0 + $0xb0] sm:$0xff]
  %v54 = vld [vmem:[%s0 + $0xb8] sm:$0xff]
  %v55 = vld [vmem:[%s0 + $0xc0] sm:$0xff]
  %v56 = vld [vmem:[%s0 + $0xc8] sm:$0xff]
  %v57 = vld [vmem:[%s0 + $0xd0] sm:$0xff]
  %v58 = vld [vmem:[%s0 + $0xd8] sm:$0xff]
  %v59 = vld [vmem:[%s0 + $0xe0] sm:$0xff]
  %v60 = vld [vmem:[%s0 + $0xe8] sm:$0xff]
  %v61 = vld [vmem:[%s0 + $0xf0] sm:$0xff]
  %v62 = vld [vmem:[%s0 + $0xf8] sm:$0xff]
  %v63 = vld [vmem:[%s0 + $0x100] sm:$0xff]
  %v64 = vld [vmem:[%s0 + $0x108] sm:$0xff]
  %v65 = vld [vmem:[%s0 + $0x110] sm:$0xff]
  %v66 = vld [vmem:[%s0 + $0x118] sm:$0xff]
  %v67 = vld [vmem:[%s0 + $0x120] sm:$0xff]
  %v68 = vld [vmem:[%s0 + $0x128] sm:$0xff]
  %v69 = vld [vmem:[%s0 + $0x130] sm:$0xff]
  %v70 = vld [vmem:[%s0 + $0x138] sm:$0xff]
  %v71 = vld [vmem:[%s0 + $0x140] sm:$0xff]
  %v72 = vld [vmem:[%s0 + $0x148] sm:$0xff]
  %v73 = vld [vmem:[%s0 + $0x150] sm:$0xff]
  %v74 = vld [vmem:[%s0 + $0x158] sm:$0xff]
  %v75 = vld [vmem:[%s0 + $0x160] sm:$0xff]
  %v76 = vld [vmem:[%s0 + $0x168] sm:$0xff]
  %v77 = vld [vmem:[%s0 + $0x170] sm:$0xff]
  %v78 = vld [vmem:[%s0 + $0x178] sm:$0xff]
  %v79 = vld [vmem:[%s0 + $0x180] sm:$0xff]
  %v80 = vld [vmem:[%s0 + $0x188] sm:$0xff]
  %v81 = vld [vmem:[%s0 + $0x190] sm:$0xff]
  %v82 = vld [vmem:[%s0 + $0x198] sm:$0xff]
  %v83 = vld [vmem:[%s0 + $0x1a0] sm:$0xff]
  %v84 = vld [vmem:[%s0 + $0x1a8] sm:$0xff]
  %v85 = vld [vmem:[%s0 + $0x1b0] sm:$0xff]
  %v86 = vld [vmem:[%s0 + $0x1b8] sm:$0xff]
  %v87 = vld [vmem:[%s0 + $0x1c0] sm:$0xff]
  %v88 = vld [vmem:[%s0 + $0x1c8] sm:$0xff]
  %v89 = vld [vmem:[%s0 + $0x1d0] sm:$0xff]
  %v90 = vld [vmem:[%s0 + $0x1d8] sm:$0xff]
  %v91 = vld [vmem:[%s0 + $0x1e0] sm:$0xff]
  %v92 = vld [vmem:[%s0 + $0x1e8] sm:$0xff]
  %v93 = vld [vmem:[%s0 + $0x1f0] sm:$0xff]
  %v94 = vld [vmem:[%s0 + $0x1f8] sm:$0xff]
  %v95 = vld [vmem:[%s0 + $0x200] sm:$0xff]
  %v96 = vld [vmem:[%s0 + $0x208] sm:$0xff]
  %v97 = vld [vmem:[%s0 + $0x210] sm:$0xff]
  %v98 = vld [vmem:[%s0 + $0x218] sm:$0xff]
  %v99 = vld [vmem:[%s0 + $0x220] sm:$0xff]
  %v100 = vld [vmem:[%s0 + $0x228] sm:$0xff]
  %v101 = vld [vmem:[%s0 + $0x230] sm:$0xff]
  %v102 = vld [vmem:[%s0 + $0x238] sm:$0xff]
  %v175 = vunpack.c.l.b16 %v31
  %v176 = vunpack.c.h.b16 %v31
  %v177 = vunpack.c.l.b16 %v32
  %v178 = vunpack.c.h.b16 %v32
  %v179 = vunpack.c.l.b16 %v33
  %v180 = vunpack.c.h.b16 %v33
  %v181 = vunpack.c.l.b16 %v34
  %v182 = vunpack.c.h.b16 %v34
  %v183 = vunpack.c.l.b16 %v35
  %v184 = vunpack.c.h.b16 %v35
  %v185 = vunpack.c.l.b16 %v36
  %v186 = vunpack.c.h.b16 %v36
  %v187 = vunpack.c.l.b16 %v37
  %v188 = vunpack.c.h.b16 %v37
  %v189 = vunpack.c.l.b16 %v38
  %v190 = vunpack.c.h.b16 %v38
  %v191 = vunpack.c.l.b16 %v39
  %v192 = vunpack.c.h.b16 %v39
  %v193 = vunpack.c.l.b16 %v40
  %v194 = vunpack.c.h.b16 %v40
  %v195 = vunpack.c.l.b16 %v41
  %v196 = vunpack.c.h.b16 %v41
  %v197 = vunpack.c.l.b16 %v42
  %v198 = vunpack.c.h.b16 %v42
  %v199 = vunpack.c.l.b16 %v43
  %v200 = vunpack.c.h.b16 %v43
  %v201 = vunpack.c.l.b16 %v44
  %v202 = vunpack.c.h.b16 %v44
  %v203 = vunpack.c.l.b16 %v45
  %v204 = vunpack.c.h.b16 %v45
  %v205 = vunpack.c.l.b16 %v46
  %v206 = vunpack.c.h.b16 %v46
  %v207 = vunpack.c.l.b16 %v47
  %v208 = vunpack.c.h.b16 %v47
  %v209 = vunpack.c.l.b16 %v48
  %v210 = vunpack.c.h.b16 %v48
  %v211 = vunpack.c.l.b16 %v49
  %v212 = vunpack.c.h.b16 %v49
  %v213 = vunpack.c.l.b16 %v50
  %v214 = vunpack.c.h.b16 %v50
  %v215 = vunpack.c.l.b16 %v51
  %v216 = vunpack.c.h.b16 %v51
  %v217 = vunpack.c.l.b16 %v52
  %v218 = vunpack.c.h.b16 %v52
  %v219 = vunpack.c.l.b16 %v53
  %v220 = vunpack.c.h.b16 %v53
  %v221 = vunpack.c.l.b16 %v54
  %v222 = vunpack.c.h.b16 %v54
  %v223 = vunpack.c.l.b16 %v55
  %v224 = vunpack.c.h.b16 %v55
  %v225 = vunpack.c.l.b16 %v56
  %v226 = vunpack.c.h.b16 %v56
  %v227 = vunpack.c.l.b16 %v57
  %v228 = vunpack.c.h.b16 %v57
  %v229 = vunpack.c.l.b16 %v58
  %v230 = vunpack.c.h.b16 %v58
  %v231 = vunpack.c.l.b16 %v59
  %v232 = vunpack.c.h.b16 %v59
  %v233 = vunpack.c.l.b16 %v60
  %v234 = vunpack.c.h.b16 %v60
  %v235 = vunpack.c.l.b16 %v61
  %v236 = vunpack.c.h.b16 %v61
  %v237 = vunpack.c.l.b16 %v62
  %v238 = vunpack.c.h.b16 %v62
  %v239 = vunpack.c.l.b16 %v63
  %v240 = vunpack.c.h.b16 %v63
  %v241 = vunpack.c.l.b16 %v64
  %v242 = vunpack.c.h.b16 %v64
  %v243 = vunpack.c.l.b16 %v65
  %v244 = vunpack.c.h.b16 %v65
  %v245 = vunpack.c.l.b16 %v66
  %v246 = vunpack.c.h.b16 %v66
  %v247 = vunpack.c.l.b16 %v67
  %v248 = vunpack.c.h.b16 %v67
  %v249 = vunpack.c.l.b16 %v68
  %v250 = vunpack.c.h.b16 %v68
  %v251 = vunpack.c.l.b16 %v69
  %v252 = vunpack.c.h.b16 %v69
  %v253 = vunpack.c.l.b16 %v70
  %v254 = vunpack.c.h.b16 %v70
  %v255 = vunpack.c.l.b16 %v71
  %v256 = vunpack.c.h.b16 %v71
  %v257 = vunpack.c.l.b16 %v72
  %v258 = vunpack.c.h.b16 %v72
  %v259 = vunpack.c.l.b16 %v73
  %v260 = vunpack.c.h.b16 %v73
  %v261 = vunpack.c.l.b16 %v74
  %v262 = vunpack.c.h.b16 %v74
  %v263 = vunpack.c.l.b16 %v75
  %v264 = vunpack.c.h.b16 %v75
  %v265 = vunpack.c.l.b16 %v76
  %v266 = vunpack.c.h.b16 %v76
  %v267 = vunpack.c.l.b16 %v77
  %v268 = vunpack.c.h.b16 %v77
  %v269 = vunpack.c.l.b16 %v78
  %v270 = vunpack.c.h.b16 %v78
  %v271 = vunpack.c.l.b16 %v79
  %v272 = vunpack.c.h.b16 %v79
  %v273 = vunpack.c.l.b16 %v80
  %v274 = vunpack.c.h.b16 %v80
  %v275 = vunpack.c.l.b16 %v81
  %v276 = vunpack.c.h.b16 %v81
  %v277 = vunpack.c.l.b16 %v82
  %v278 = vunpack.c.h.b16 %v82
  %v279 = vunpack.c.l.b16 %v83
  %v280 = vunpack.c.h.b16 %v83
  %v281 = vunpack.c.l.b16 %v84
  %v282 = vunpack.c.h.b16 %v84
  %v283 = vunpack.c.l.b16 %v85
  %v284 = vunpack.c.h.b16 %v85
  %v285 = vunpack.c.l.b16 %v86
  %v286 = vunpack.c.h.b16 %v86
  %v287 = vunpack.c.l.b16 %v87
  %v288 = vunpack.c.h.b16 %v87
  %v289 = vunpack.c.l.b16 %v88
  %v290 = vunpack.c.h.b16 %v88
  %v291 = vunpack.c.l.b16 %v89
  %v292 = vunpack.c.h.b16 %v89
  %v293 = vunpack.c.l.b16 %v90
  %v294 = vunpack.c.h.b16 %v90
  %v295 = vunpack.c.l.b16 %v91
  %v296 = vunpack.c.h.b16 %v91
  %v297 = vunpack.c.l.b16 %v92
  %v298 = vunpack.c.h.b16 %v92
  %v299 = vunpack.c.l.b16 %v93
  %v300 = vunpack.c.h.b16 %v93
  %v301 = vunpack.c.l.b16 %v94
  %v302 = vunpack.c.h.b16 %v94
  %v303 = vunpack.c.l.b16 %v95
  %v304 = vunpack.c.h.b16 %v95
  %v305 = vunpack.c.l.b16 %v96
  %v306 = vunpack.c.h.b16 %v96
  %v307 = vunpack.c.l.b16 %v97
  %v308 = vunpack.c.h.b16 %v97
  %v309 = vunpack.c.l.b16 %v98
  %v310 = vunpack.c.h.b16 %v98
  %v311 = vunpack.c.l.b16 %v99
  %v312 = vunpack.c.h.b16 %v99
  %v313 = vunpack.c.l.b16 %v100
  %v314 = vunpack.c.h.b16 %v100
  %v315 = vunpack.c.l.b16 %v101
  %v316 = vunpack.c.h.b16 %v101
  %v317 = vunpack.c.l.b16 %v102
  %v318 = vunpack.c.h.b16 %v102
  %v319 = vpack.c.b16 %v191, %v175
  %v320 = vpack.c.b16 %v192, %v176
  %v321 = vpack.c.b16 %v193, %v177
  %v322 = vpack.c.b16 %v194, %v178
  %v323 = vpack.c.b16 %v195, %v179
  %v324 = vpack.c.b16 %v196, %v180
  %v325 = vpack.c.b16 %v197, %v181
  %v326 = vpack.c.b16 %v198, %v182
  %v327 = vpack.c.b16 %v199, %v183
  %v328 = vpack.c.b16 %v200, %v184
  %v329 = vpack.c.b16 %v201, %v185
  %v330 = vpack.c.b16 %v202, %v186
  %v331 = vpack.c.b16 %v203, %v187
  %v332 = vpack.c.b16 %v204, %v188
  %v333 = vpack.c.b16 %v205, %v189
  %v334 = vpack.c.b16 %v206, %v190
  %v335 = vpack.c.b16 %v223, %v207
  %v336 = vpack.c.b16 %v224, %v208
  %v337 = vpack.c.b16 %v225, %v209
  %v338 = vpack.c.b16 %v226, %v210
  %v339 = vpack.c.b16 %v227, %v211
  %v340 = vpack.c.b16 %v228, %v212
  %v341 = vpack.c.b16 %v229, %v213
  %v342 = vpack.c.b16 %v230, %v214
  %v343 = vpack.c.b16 %v231, %v215
  %v344 = vpack.c.b16 %v232, %v216
  %v345 = vpack.c.b16 %v233, %v217
  %v346 = vpack.c.b16 %v234, %v218
  %v347 = vpack.c.b16 %v235, %v219
  %v348 = vpack.c.b16 %v236, %v220
  %v349 = vpack.c.b16 %v237, %v221
  %v350 = vpack.c.b16 %v238, %v222
  %v351 = vpack.c.b16 %v255, %v239
  %v352 = vpack.c.b16 %v256, %v240
  %v353 = vpack.c.b16 %v257, %v241
  %v354 = vpack.c.b16 %v258, %v242
  %v355 = vpack.c.b16 %v259, %v243
  %v356 = vpack.c.b16 %v260, %v244
  %v357 = vpack.c.b16 %v261, %v245
  %v358 = vpack.c.b16 %v262, %v246
  %v359 = vpack.c.b16 %v263, %v247
  %v360 = vpack.c.b16 %v264, %v248
  %v361 = vpack.c.b16 %v265, %v249
  %v362 = vpack.c.b16 %v266, %v250
  %v363 = vpack.c.b16 %v267, %v251
  %v364 = vpack.c.b16 %v268, %v252
  %v365 = vpack.c.b16 %v269, %v253
  %v366 = vpack.c.b16 %v270, %v254
  %v367 = vpack.c.b16 %v287, %v271
  %v368 = vpack.c.b16 %v288, %v272
  %v369 = vpack.c.b16 %v289, %v273
  %v370 = vpack.c.b16 %v290, %v274
  %v371 = vpack.c.b16 %v291, %v275
  %v372 = vpack.c.b16 %v292, %v276
  %v373 = vpack.c.b16 %v293, %v277
  %v374 = vpack.c.b16 %v294, %v278
  %v375 = vpack.c.b16 %v295, %v279
  %v376 = vpack.c.b16 %v296, %v280
  %v377 = vpack.c.b16 %v297, %v281
  %v378 = vpack.c.b16 %v298, %v282
  %v379 = vpack.c.b16 %v299, %v283
  %v380 = vpack.c.b16 %v300, %v284
  %v381 = vpack.c.b16 %v301, %v285
  %v382 = vpack.c.b16 %v302, %v286
  %v383 = vpack.c.b16 %v303, %v303
  %v384 = vpack.c.b16 %v304, %v304
  %v385 = vpack.c.b16 %v305, %v305
  %v386 = vpack.c.b16 %v306, %v306
  %v387 = vpack.c.b16 %v307, %v307
  %v388 = vpack.c.b16 %v308, %v308
  %v389 = vpack.c.b16 %v309, %v309
  %v390 = vpack.c.b16 %v310, %v310
  %v391 = vpack.c.b16 %v311, %v311
  %v392 = vpack.c.b16 %v312, %v312
  %v393 = vpack.c.b16 %v313, %v313
  %v394 = vpack.c.b16 %v314, %v314
  %v395 = vpack.c.b16 %v315, %v315
  %v396 = vpack.c.b16 %v316, %v316
  %v397 = vpack.c.b16 %v317, %v317
  %v398 = vpack.c.b16 %v318, %v318
  %vm463 = vcmask 588800
  %v465 = vsel %vm463, %v30, 0
  %vm467 = vcmask 1043456
  %v469 = vsel %vm467, %v383, 0
  %v472 = vsel %vm467, %v384, 0
  %v475 = vsel %vm467, %v385, 0
  %v478 = vsel %vm467, %v386, 0
  %v481 = vsel %vm467, %v387, 0
  %v484 = vsel %vm467, %v388, 0
  %v487 = vsel %vm467, %v389, 0
  %v490 = vsel %vm467, %v390, 0
  %v493 = vsel %vm467, %v391, 0
  %v496 = vsel %vm467, %v392, 0
  %v499 = vsel %vm467, %v393, 0
  %v502 = vsel %vm467, %v394, 0
  %v505 = vsel %vm467, %v395, 0
  %v508 = vsel %vm467, %v396, 0
  %v511 = vsel %vm467, %v397, 0
  %v514 = vsel %vm467, %v398, 0
  %516 = vmatprep.subr.bf16.mxu0 0
  %517 = vmatpush1.bf16.msra.mxu0 0
  %518 = vmatprep.subr.bf16.mxu0 0
  %519 = vmatpush1.bf16.msra.mxu0 0
  %520 = vmatprep.subr.bf16.mxu0 0
  %521 = vmatpush1.bf16.msra.mxu0 0
  %522 = vmatprep.subr.bf16.mxu0 %v472
  %523 = vmatpush1.bf16.msra.mxu0 %v469
  %524 = vmatprep.subr.bf16.mxu0 %v368
  %525 = vmatpush1.bf16.msra.mxu0 %v367
  %526 = vmatprep.subr.bf16.mxu0 %v352
  %527 = vmatpush1.bf16.msra.mxu0 %v351
  %528 = vmatprep.subr.bf16.mxu0 %v336
  %529 = vmatpush1.bf16.msra.mxu0 %v335
  %530 = vmatprep.subr.bf16.mxu0 %v320
  %531 = vmatpush1.bf16.msra.mxu0 %v319
  %532 = vmatprep.subr.bf16.mxu0 0
  %533 = vmatpush2.bf16.msra.mxu0 0
  %534 = vmatprep.subr.bf16.mxu0 0
  %535 = vmatpush2.bf16.msra.mxu0 0
  %536 = vmatprep.subr.bf16.mxu0 0
  %537 = vmatpush2.bf16.msra.mxu0 0
  %538 = vmatprep.subr.bf16.mxu0 0
  %539 = vmatpush2.bf16.msra.mxu0 0
  %540 = vmatprep.subr.bf16.mxu0 0
  %541 = vmatpush2.bf16.msra.mxu0 0
  %542 = vmatprep.subr.bf16.mxu0 0
  %543 = vmatpush2.bf16.msra.mxu0 0
  %544 = vmatprep.subr.bf16.mxu0 0
  %545 = vmatpush2.bf16.msra.mxu0 0
  %546 = vmatprep.subr.bf16.mxu0 0
  %547 = vmatpush2.bf16.msra.mxu0 0
  %548 = vmatprep.mubr.bf16.mxu0 0
  %549 = vmatmul.mubr.bf16.gmra.mxu0 %v465
  %v550 = vpop.f32.mrf.mxu0
  %v551 = vadd.f32 0.0, %v550
  %v552 = vpop.f32.mrf.mxu0
  %v553 = vadd.f32 0.0, %v552
  %v554 = vpop.f32.mrf.mxu0
  %v555 = vpop.f32.mrf.mxu0
  %556 = vdwg.mxu0
  %557 = vmatprep.subr.bf16.mxu0 0
  %558 = vmatpush1.bf16.msra.mxu0 0
  %559 = vmatprep.subr.bf16.mxu0 0
  %560 = vmatpush1.bf16.msra.mxu0 0
  %561 = vmatprep.subr.bf16.mxu0 0
  %562 = vmatpush1.bf16.msra.mxu0 0
  %563 = vmatprep.subr.bf16.mxu0 %v478
  %564 = vmatpush1.bf16.msra.mxu0 %v475
  %565 = vmatprep.subr.bf16.mxu0 %v370
  %566 = vmatpush1.bf16.msra.mxu0 %v369
  %567 = vmatprep.subr.bf16.mxu0 %v354
  %568 = vmatpush1.bf16.msra.mxu0 %v353
  %569 = vmatprep.subr.bf16.mxu0 %v338
  %570 = vmatpush1.bf16.msra.mxu0 %v337
  %571 = vmatprep.subr.bf16.mxu0 %v322
  %572 = vmatpush1.bf16.msra.mxu0 %v321
  %573 = vmatprep.subr.bf16.mxu0 0
  %574 = vmatpush2.bf16.msra.mxu0 0
  %575 = vmatprep.subr.bf16.mxu0 0
  %576 = vmatpush2.bf16.msra.mxu0 0
  %577 = vmatprep.subr.bf16.mxu0 0
  %578 = vmatpush2.bf16.msra.mxu0 0
  %579 = vmatprep.subr.bf16.mxu0 0
  %580 = vmatpush2.bf16.msra.mxu0 0
  %581 = vmatprep.subr.bf16.mxu0 0
  %582 = vmatpush2.bf16.msra.mxu0 0
  %583 = vmatprep.subr.bf16.mxu0 0
  %584 = vmatpush2.bf16.msra.mxu0 0
  %585 = vmatprep.subr.bf16.mxu0 0
  %586 = vmatpush2.bf16.msra.mxu0 0
  %587 = vmatprep.subr.bf16.mxu0 0
  %588 = vmatpush2.bf16.msra.mxu0 0
  %589 = vmatprep.mubr.bf16.mxu0 0
  %590 = vmatmul.mubr.bf16.gmra.mxu0 %v465
  %v591 = vpop.f32.mrf.mxu0
  %v592 = vadd.f32 0.0, %v591
  %v593 = vpop.f32.mrf.mxu0
  %v594 = vadd.f32 0.0, %v593
  %v595 = vpop.f32.mrf.mxu0
  %v596 = vpop.f32.mrf.mxu0
  %597 = vdwg.mxu0
  %598 = vmatprep.subr.bf16.mxu0 0
  %599 = vmatpush1.bf16.msra.mxu0 0
  %600 = vmatprep.subr.bf16.mxu0 0
  %601 = vmatpush1.bf16.msra.mxu0 0
  %602 = vmatprep.subr.bf16.mxu0 0
  %603 = vmatpush1.bf16.msra.mxu0 0
  %604 = vmatprep.subr.bf16.mxu0 %v484
  %605 = vmatpush1.bf16.msra.mxu0 %v481
  %606 = vmatprep.subr.bf16.mxu0 %v372
  %607 = vmatpush1.bf16.msra.mxu0 %v371
  %608 = vmatprep.subr.bf16.mxu0 %v356
  %609 = vmatpush1.bf16.msra.mxu0 %v355
  %610 = vmatprep.subr.bf16.mxu0 %v340
  %611 = vmatpush1.bf16.msra.mxu0 %v339
  %612 = vmatprep.subr.bf16.mxu0 %v324
  %613 = vmatpush1.bf16.msra.mxu0 %v323
  %614 = vmatprep.subr.bf16.mxu0 0
  %615 = vmatpush2.bf16.msra.mxu0 0
  %616 = vmatprep.subr.bf16.mxu0 0
  %617 = vmatpush2.bf16.msra.mxu0 0
  %618 = vmatprep.subr.bf16.mxu0 0
  %619 = vmatpush2.bf16.msra.mxu0 0
  %620 = vmatprep.subr.bf16.mxu0 0
  %621 = vmatpush2.bf16.msra.mxu0 0
  %622 = vmatprep.subr.bf16.mxu0 0
  %623 = vmatpush2.bf16.msra.mxu0 0
  %624 = vmatprep.subr.bf16.mxu0 0
  %625 = vmatpush2.bf16.msra.mxu0 0
  %626 = vmatprep.subr.bf16.mxu0 0
  %627 = vmatpush2.bf16.msra.mxu0 0
  %628 = vmatprep.subr.bf16.mxu0 0
  %629 = vmatpush2.bf16.msra.mxu0 0
  %630 = vmatprep.mubr.bf16.mxu0 0
  %631 = vmatmul.mubr.bf16.gmra.mxu0 %v465
  %v632 = vpop.f32.mrf.mxu0
  %v633 = vadd.f32 0.0, %v632
  %v634 = vpop.f32.mrf.mxu0
  %v635 = vadd.f32 0.0, %v634
  %v636 = vpop.f32.mrf.mxu0
  %v637 = vpop.f32.mrf.mxu0
  %638 = vdwg.mxu0
  %639 = vmatprep.subr.bf16.mxu0 0
  %640 = vmatpush1.bf16.msra.mxu0 0
  %641 = vmatprep.subr.bf16.mxu0 0
  %642 = vmatpush1.bf16.msra.mxu0 0
  %643 = vmatprep.subr.bf16.mxu0 0
  %644 = vmatpush1.bf16.msra.mxu0 0
  %645 = vmatprep.subr.bf16.mxu0 %v490
  %646 = vmatpush1.bf16.msra.mxu0 %v487
  %647 = vmatprep.subr.bf16.mxu0 %v374
  %648 = vmatpush1.bf16.msra.mxu0 %v373
  %649 = vmatprep.subr.bf16.mxu0 %v358
  %650 = vmatpush1.bf16.msra.mxu0 %v357
  %651 = vmatprep.subr.bf16.mxu0 %v342
  %652 = vmatpush1.bf16.msra.mxu0 %v341
  %653 = vmatprep.subr.bf16.mxu0 %v326
  %654 = vmatpush1.bf16.msra.mxu0 %v325
  %655 = vmatprep.subr.bf16.mxu0 0
  %656 = vmatpush2.bf16.msra.mxu0 0
  %657 = vmatprep.subr.bf16.mxu0 0
  %658 = vmatpush2.bf16.msra.mxu0 0
  %659 = vmatprep.subr.bf16.mxu0 0
  %660 = vmatpush2.bf16.msra.mxu0 0
  %661 = vmatprep.subr.bf16.mxu0 0
  %662 = vmatpush2.bf16.msra.mxu0 0
  %663 = vmatprep.subr.bf16.mxu0 0
  %664 = vmatpush2.bf16.msra.mxu0 0
  %665 = vmatprep.subr.bf16.mxu0 0
  %666 = vmatpush2.bf16.msra.mxu0 0
  %667 = vmatprep.subr.bf16.mxu0 0
  %668 = vmatpush2.bf16.msra.mxu0 0
  %669 = vmatprep.subr.bf16.mxu0 0
  %670 = vmatpush2.bf16.msra.mxu0 0
  %671 = vmatprep.mubr.bf16.mxu0 0
  %672 = vmatmul.mubr.bf16.gmra.mxu0 %v465
  %v673 = vpop.f32.mrf.mxu0
  %v674 = vadd.f32 0.0, %v673
  %v675 = vpop.f32.mrf.mxu0
  %v676 = vadd.f32 0.0, %v675
  %v677 = vpop.f32.mrf.mxu0
  %v678 = vpop.f32.mrf.mxu0
  %679 = vdwg.mxu0
  %680 = vmatprep.subr.bf16.mxu0 0
  %681 = vmatpush1.bf16.msra.mxu0 0
  %682 = vmatprep.subr.bf16.mxu0 0
  %683 = vmatpush1.bf16.msra.mxu0 0
  %684 = vmatprep.subr.bf16.mxu0 0
  %685 = vmatpush1.bf16.msra.mxu0 0
  %686 = vmatprep.subr.bf16.mxu0 %v496
  %687 = vmatpush1.bf16.msra.mxu0 %v493
  %688 = vmatprep.subr.bf16.mxu0 %v376
  %689 = vmatpush1.bf16.msra.mxu0 %v375
  %690 = vmatprep.subr.bf16.mxu0 %v360
  %691 = vmatpush1.bf16.msra.mxu0 %v359
  %692 = vmatprep.subr.bf16.mxu0 %v344
  %693 = vmatpush1.bf16.msra.mxu0 %v343
  %694 = vmatprep.subr.bf16.mxu0 %v328
  %695 = vmatpush1.bf16.msra.mxu0 %v327
  %696 = vmatprep.subr.bf16.mxu0 0
  %697 = vmatpush2.bf16.msra.mxu0 0
  %698 = vmatprep.subr.bf16.mxu0 0
  %699 = vmatpush2.bf16.msra.mxu0 0
  %700 = vmatprep.subr.bf16.mxu0 0
  %701 = vmatpush2.bf16.msra.mxu0 0
  %702 = vmatprep.subr.bf16.mxu0 0
  %703 = vmatpush2.bf16.msra.mxu0 0
  %704 = vmatprep.subr.bf16.mxu0 0
  %705 = vmatpush2.bf16.msra.mxu0 0
  %706 = vmatprep.subr.bf16.mxu0 0
  %707 = vmatpush2.bf16.msra.mxu0 0
  %708 = vmatprep.subr.bf16.mxu0 0
  %709 = vmatpush2.bf16.msra.mxu0 0
  %710 = vmatprep.subr.bf16.mxu0 0
  %711 = vmatpush2.bf16.msra.mxu0 0
  %712 = vmatprep.mubr.bf16.mxu0 0
  %713 = vmatmul.mubr.bf16.gmra.mxu0 %v465
  %v714 = vpop.f32.mrf.mxu0
  %v715 = vadd.f32 0.0, %v714
  %v716 = vpop.f32.mrf.mxu0
  %v717 = vadd.f32 0.0, %v716
  %v718 = vpop.f32.mrf.mxu0
  %v719 = vpop.f32.mrf.mxu0
  %720 = vdwg.mxu0
  %721 = vmatprep.subr.bf16.mxu0 0
  %722 = vmatpush1.bf16.msra.mxu0 0
  %723 = vmatprep.subr.bf16.mxu0 0
  %724 = vmatpush1.bf16.msra.mxu0 0
  %725 = vmatprep.subr.bf16.mxu0 0
  %726 = vmatpush1.bf16.msra.mxu0 0
  %727 = vmatprep.subr.bf16.mxu0 %v502
  %728 = vmatpush1.bf16.msra.mxu0 %v499
  %729 = vmatprep.subr.bf16.mxu0 %v378
  %730 = vmatpush1.bf16.msra.mxu0 %v377
  %731 = vmatprep.subr.bf16.mxu0 %v362
  %732 = vmatpush1.bf16.msra.mxu0 %v361
  %733 = vmatprep.subr.bf16.mxu0 %v346
  %734 = vmatpush1.bf16.msra.mxu0 %v345
  %735 = vmatprep.subr.bf16.mxu0 %v330
  %736 = vmatpush1.bf16.msra.mxu0 %v329
  %737 = vmatprep.subr.bf16.mxu0 0
  %738 = vmatpush2.bf16.msra.mxu0 0
  %739 = vmatprep.subr.bf16.mxu0 0
  %740 = vmatpush2.bf16.msra.mxu0 0
  %741 = vmatprep.subr.bf16.mxu0 0
  %742 = vmatpush2.bf16.msra.mxu0 0
  %743 = vmatprep.subr.bf16.mxu0 0
  %744 = vmatpush2.bf16.msra.mxu0 0
  %745 = vmatprep.subr.bf16.mxu0 0
  %746 = vmatpush2.bf16.msra.mxu0 0
  %747 = vmatprep.subr.bf16.mxu0 0
  %748 = vmatpush2.bf16.msra.mxu0 0
  %749 = vmatprep.subr.bf16.mxu0 0
  %750 = vmatpush2.bf16.msra.mxu0 0
  %751 = vmatprep.subr.bf16.mxu0 0
  %752 = vmatpush2.bf16.msra.mxu0 0
  %753 = vmatprep.mubr.bf16.mxu0 0
  %754 = vmatmul.mubr.bf16.gmra.mxu0 %v465
  %v755 = vpop.f32.mrf.mxu0
  %v756 = vadd.f32 0.0, %v755
  %v757 = vpop.f32.mrf.mxu0
  %v758 = vadd.f32 0.0, %v757
  %v759 = vpop.f32.mrf.mxu0
  %v760 = vpop.f32.mrf.mxu0
  %761 = vdwg.mxu0
  %762 = vmatprep.subr.bf16.mxu0 0
  %763 = vmatpush1.bf16.msra.mxu0 0
  %764 = vmatprep.subr.bf16.mxu0 0
  %765 = vmatpush1.bf16.msra.mxu0 0
  %766 = vmatprep.subr.bf16.mxu0 0
  %767 = vmatpush1.bf16.msra.mxu0 0
  %768 = vmatprep.subr.bf16.mxu0 %v508
  %769 = vmatpush1.bf16.msra.mxu0 %v505
  %770 = vmatprep.subr.bf16.mxu0 %v380
  %771 = vmatpush1.bf16.msra.mxu0 %v379
  %772 = vmatprep.subr.bf16.mxu0 %v364
  %773 = vmatpush1.bf16.msra.mxu0 %v363
  %774 = vmatprep.subr.bf16.mxu0 %v348
  %775 = vmatpush1.bf16.msra.mxu0 %v347
  %776 = vmatprep.subr.bf16.mxu0 %v332
  %777 = vmatpush1.bf16.msra.mxu0 %v331
  %778 = vmatprep.subr.bf16.mxu0 0
  %779 = vmatpush2.bf16.msra.mxu0 0
  %780 = vmatprep.subr.bf16.mxu0 0
  %781 = vmatpush2.bf16.msra.mxu0 0
  %782 = vmatprep.subr.bf16.mxu0 0
  %783 = vmatpush2.bf16.msra.mxu0 0
  %784 = vmatprep.subr.bf16.mxu0 0
  %785 = vmatpush2.bf16.msra.mxu0 0
  %786 = vmatprep.subr.bf16.mxu0 0
  %787 = vmatpush2.bf16.msra.mxu0 0
  %788 = vmatprep.subr.bf16.mxu0 0
  %789 = vmatpush2.bf16.msra.mxu0 0
  %790 = vmatprep.subr.bf16.mxu0 0
  %791 = vmatpush2.bf16.msra.mxu0 0
  %792 = vmatprep.subr.bf16.mxu0 0
  %793 = vmatpush2.bf16.msra.mxu0 0
  %794 = vmatprep.mubr.bf16.mxu0 0
  %795 = vmatmul.mubr.bf16.gmra.mxu0 %v465
  %v796 = vpop.f32.mrf.mxu0
  %v797 = vadd.f32 0.0, %v796
  %v798 = vpop.f32.mrf.mxu0
  %v799 = vadd.f32 0.0, %v798
  %v800 = vpop.f32.mrf.mxu0
  %v801 = vpop.f32.mrf.mxu0
  %802 = vdwg.mxu0
  %803 = vmatprep.subr.bf16.mxu0 0
  %804 = vmatpush1.bf16.msra.mxu0 0
  %805 = vmatprep.subr.bf16.mxu0 0
  %806 = vmatpush1.bf16.msra.mxu0 0
  %807 = vmatprep.subr.bf16.mxu0 0
  %808 = vmatpush1.bf16.msra.mxu0 0
  %809 = vmatprep.subr.bf16.mxu0 %v514
  %810 = vmatpush1.bf16.msra.mxu0 %v511
  %811 = vmatprep.subr.bf16.mxu0 %v382
  %812 = vmatpush1.bf16.msra.mxu0 %v381
  %813 = vmatprep.subr.bf16.mxu0 %v366
  %814 = vmatpush1.bf16.msra.mxu0 %v365
  %815 = vmatprep.subr.bf16.mxu0 %v350
  %816 = vmatpush1.bf16.msra.mxu0 %v349
  %817 = vmatprep.subr.bf16.mxu0 %v334
  %818 = vmatpush1.bf16.msra.mxu0 %v333
  %819 = vmatprep.subr.bf16.mxu0 0
  %820 = vmatpush2.bf16.msra.mxu0 0
  %821 = vmatprep.subr.bf16.mxu0 0
  %822 = vmatpush2.bf16.msra.mxu0 0
  %823 = vmatprep.subr.bf16.mxu0 0
  %824 = vmatpush2.bf16.msra.mxu0 0
  %825 = vmatprep.subr.bf16.mxu0 0
  %826 = vmatpush2.bf16.msra.mxu0 0
  %827 = vmatprep.subr.bf16.mxu0 0
  %828 = vmatpush2.bf16.msra.mxu0 0
  %829 = vmatprep.subr.bf16.mxu0 0
  %830 = vmatpush2.bf16.msra.mxu0 0
  %831 = vmatprep.subr.bf16.mxu0 0
  %832 = vmatpush2.bf16.msra.mxu0 0
  %833 = vmatprep.subr.bf16.mxu0 0
  %834 = vmatpush2.bf16.msra.mxu0 0
  %835 = vmatprep.mubr.bf16.mxu0 0
  %836 = vmatmul.mubr.bf16.gmra.mxu0 %v465
  %v837 = vpop.f32.mrf.mxu0
  %v838 = vadd.f32 0.0, %v837
  %v839 = vpop.f32.mrf.mxu0
  %v840 = vadd.f32 0.0, %v839
  %v841 = vpop.f32.mrf.mxu0
  %v842 = vpop.f32.mrf.mxu0
  %843 = vdwg.mxu0
  %v844 = vadd.f32 %v551, %v553
  %v845 = vadd.f32 %v844, %v592
  %v846 = vadd.f32 %v845, %v594
  %v847 = vadd.f32 %v846, %v633
  %v848 = vadd.f32 %v847, %v635
  %v849 = vadd.f32 %v848, %v674
  %v850 = vadd.f32 %v849, %v676
  %v851 = vadd.f32 %v850, %v715
  %v852 = vadd.f32 %v851, %v717
  %v853 = vadd.f32 %v852, %v756
  %v854 = vadd.f32 %v853, %v758
  %v855 = vadd.f32 %v854, %v797
  %v856 = vadd.f32 %v855, %v799
  %v857 = vadd.f32 %v856, %v838
  %v858 = vadd.f32 %v857, %v840
  %859 = vadd.xlane.f32.xlu0 %v858
  %v860 = vpop.xlane.xlu0 %859
  %v861 = vmul.f32 %v860, 0.00048828125
  %v862 = vsub.f32 %v551, %v861
  %v863 = vsub.f32 %v553, %v861
  %v864 = vsub.f32 %v592, %v861
  %v865 = vsub.f32 %v594, %v861
  %v866 = vsub.f32 %v633, %v861
  %v867 = vsub.f32 %v635, %v861
  %v868 = vsub.f32 %v674, %v861
  %v869 = vsub.f32 %v676, %v861
  %v870 = vsub.f32 %v715, %v861
  %v871 = vsub.f32 %v717, %v861
  %v872 = vsub.f32 %v756, %v861
  %v873 = vsub.f32 %v758, %v861
  %v874 = vsub.f32 %v797, %v861
  %v875 = vsub.f32 %v799, %v861
  %v876 = vsub.f32 %v838, %v861
  %v877 = vsub.f32 %v840, %v861
  %v878 = vmul.f32 %v862, %v862
  %v879 = vmul.f32 %v863, %v863
  %v880 = vmul.f32 %v864, %v864
  %v881 = vmul.f32 %v865, %v865
  %v882 = vmul.f32 %v866, %v866
  %v883 = vmul.f32 %v867, %v867
  %v884 = vmul.f32 %v868, %v868
  %v885 = vmul.f32 %v869, %v869
  %v886 = vmul.f32 %v870, %v870
  %v887 = vmul.f32 %v871, %v871
  %v888 = vmul.f32 %v872, %v872
  %v889 = vmul.f32 %v873, %v873
  %v890 = vmul.f32 %v874, %v874
  %v891 = vmul.f32 %v875, %v875
  %v892 = vmul.f32 %v876, %v876
  %v893 = vmul.f32 %v877, %v877
  %v894 = vadd.f32 %v878, %v879
  %v895 = vadd.f32 %v894, %v880
  %v896 = vadd.f32 %v895, %v881
  %v897 = vadd.f32 %v896, %v882
  %v898 = vadd.f32 %v897, %v883
  %v899 = vadd.f32 %v898, %v884
  %v900 = vadd.f32 %v899, %v885
  %v901 = vadd.f32 %v900, %v886
  %v902 = vadd.f32 %v901, %v887
  %v903 = vadd.f32 %v902, %v888
  %v904 = vadd.f32 %v903, %v889
  %v905 = vadd.f32 %v904, %v890
  %v906 = vadd.f32 %v905, %v891
  %v907 = vadd.f32 %v906, %v892
  %v908 = vadd.f32 %v907, %v893
  %909 = vadd.xlane.f32.xlu0 %v908
  %v910 = vpop.xlane.xlu0 %909
  %v911 = vmul.f32 %v910, 0.00048828125
  %v912 = vadd.f32 %v911, 1e-05
  %v913 = vrsqrt.pop %v912
  %v914 = vmul.f32 %v862, %v913
  %v915 = vmul.f32 %v863, %v913
  %v916 = vmul.f32 %v864, %v913
  %v917 = vmul.f32 %v865, %v913
  %v918 = vmul.f32 %v866, %v913
  %v919 = vmul.f32 %v867, %v913
  %v920 = vmul.f32 %v868, %v913
  %v921 = vmul.f32 %v869, %v913
  %v922 = vmul.f32 %v870, %v913
  %v923 = vmul.f32 %v871, %v913
  %v924 = vmul.f32 %v872, %v913
  %v925 = vmul.f32 %v873, %v913
  %v926 = vmul.f32 %v874, %v913
  %v927 = vmul.f32 %v875, %v913
  %v928 = vmul.f32 %v876, %v913
  %v929 = vmul.f32 %v877, %v913
  %v930 = vld [vmem:[%s2] sm:$0xff]
  %932 = vset.pattern.permute.xlu0 0
  %933 = vperm.xlu0 %932, %v930
  %v934 = vpop.permute.xlu0 %933
  %v936 = vmul.f32 %v914, %v934
  %v937 = vmul.f32 %v915, %v934
  %v938 = vmul.f32 %v916, %v934
  %v939 = vmul.f32 %v917, %v934
  %v940 = vmul.f32 %v918, %v934
  %v941 = vmul.f32 %v919, %v934
  %v942 = vmul.f32 %v920, %v934
  %v943 = vmul.f32 %v921, %v934
  %v944 = vmul.f32 %v922, %v934
  %v945 = vmul.f32 %v923, %v934
  %v946 = vmul.f32 %v924, %v934
  %v947 = vmul.f32 %v925, %v934
  %v948 = vmul.f32 %v926, %v934
  %v949 = vmul.f32 %v927, %v934
  %v950 = vmul.f32 %v928, %v934
  %v951 = vmul.f32 %v929, %v934
  %v952 = vld [vmem:[%s3] sm:$0xff]
  %954 = vset.pattern.permute.xlu0 0
  %955 = vperm.xlu0 %954, %v952
  %v956 = vpop.permute.xlu0 %955
  %v958 = vadd.f32 %v936, %v956
  %v959 = vadd.f32 %v937, %v956
  %v960 = vadd.f32 %v938, %v956
  %v961 = vadd.f32 %v939, %v956
  %v962 = vadd.f32 %v940, %v956
  %v963 = vadd.f32 %v941, %v956
  %v964 = vadd.f32 %v942, %v956
  %v965 = vadd.f32 %v943, %v956
  %v966 = vadd.f32 %v944, %v956
  %v967 = vadd.f32 %v945, %v956
  %v968 = vadd.f32 %v946, %v956
  %v969 = vadd.f32 %v947, %v956
  %v970 = vadd.f32 %v948, %v956
  %v971 = vadd.f32 %v949, %v956
  %v972 = vadd.f32 %v950, %v956
  %v973 = vadd.f32 %v951, %v956
  %v974 = vld [vmem:[%s5] sm:$0xf]
  %v975 = vld [vmem:[%s4] sm:$0xff]
  %v976 = vld [vmem:[%s4 + $0x8] sm:$0xff]
  %v977 = vld [vmem:[%s4 + $0x10] sm:$0xff]
  %v978 = vld [vmem:[%s4 + $0x18] sm:$0xff]
  %v983 = vcombine.high %v975, %v975
  %v985 = vunpack.c.l.s4 1983009808
  %v986 = vunpack.c.0.s8 %v985
  %v987 = vlaneseq
  %v988 = vshrl.u32 %v987, 7
  %v989 = vsub.s32 %v986, %v988
  %v990 = vrot.slane %v975, %v989
  %v992 = vunpack.c.l.s4 1983009808
  %v993 = vunpack.c.0.s8 %v992
  %v994 = vlaneseq
  %v995 = vshrl.u32 %v994, 7
  %v996 = vsub.s32 %v993, %v995
  %v997 = vrot.slane %v983, %v996
  %v998 = vcombine.high %v990, %v990
  %v999 = vcombine.high %v997, %v997
  %v1000 = vcombine.high %v976, %v976
  %v1002 = vunpack.c.l.s4 1983009808
  %v1003 = vunpack.c.0.s8 %v1002
  %v1004 = vlaneseq
  %v1005 = vshrl.u32 %v1004, 7
  %v1006 = vsub.s32 %v1003, %v1005
  %v1007 = vrot.slane %v976, %v1006
  %v1009 = vunpack.c.l.s4 1983009808
  %v1010 = vunpack.c.0.s8 %v1009
  %v1011 = vlaneseq
  %v1012 = vshrl.u32 %v1011, 7
  %v1013 = vsub.s32 %v1010, %v1012
  %v1014 = vrot.slane %v1000, %v1013
  %v1015 = vcombine.high %v1007, %v1007
  %v1016 = vcombine.high %v1014, %v1014
  %v1017 = vcombine.high %v977, %v977
  %v1019 = vunpack.c.l.s4 1983009808
  %v1020 = vunpack.c.0.s8 %v1019
  %v1021 = vlaneseq
  %v1022 = vshrl.u32 %v1021, 7
  %v1023 = vsub.s32 %v1020, %v1022
  %v1024 = vrot.slane %v977, %v1023
  %v1026 = vunpack.c.l.s4 1983009808
  %v1027 = vunpack.c.0.s8 %v1026
  %v1028 = vlaneseq
  %v1029 = vshrl.u32 %v1028, 7
  %v1030 = vsub.s32 %v1027, %v1029
  %v1031 = vrot.slane %v1017, %v1030
  %v1032 = vcombine.high %v1024, %v1024
  %v1033 = vcombine.high %v1031, %v1031
  %v1034 = vcombine.high %v978, %v978
  %v1036 = vunpack.c.l.s4 1983009808
  %v1037 = vunpack.c.0.s8 %v1036
  %v1038 = vlaneseq
  %v1039 = vshrl.u32 %v1038, 7
  %v1040 = vsub.s32 %v1037, %v1039
  %v1041 = vrot.slane %v978, %v1040
  %v1043 = vunpack.c.l.s4 1983009808
  %v1044 = vunpack.c.0.s8 %v1043
  %v1045 = vlaneseq
  %v1046 = vshrl.u32 %v1045, 7
  %v1047 = vsub.s32 %v1044, %v1046
  %v1048 = vrot.slane %v1034, %v1047
  %v1049 = vcombine.high %v1041, %v1041
  %v1050 = vcombine.high %v1048, %v1048
  %vm1051 = vcmask 31744
  %v1053 = vsel %vm1051, %v974, 0
  %vm1055 = vcmask 1041408
  %v1057 = vsel %vm1055, %v990, 0
  %v1060 = vsel %vm1055, %v998, 0
  %v1063 = vsel %vm1055, %v997, 0
  %v1066 = vsel %vm1055, %v999, 0
  %v1069 = vsel %vm1055, %v1007, 0
  %v1072 = vsel %vm1055, %v1015, 0
  %v1075 = vsel %vm1055, %v1014, 0
  %v1078 = vsel %vm1055, %v1016, 0
  %v1081 = vsel %vm1055, %v1024, 0
  %v1084 = vsel %vm1055, %v1032, 0
  %v1087 = vsel %vm1055, %v1031, 0
  %v1090 = vsel %vm1055, %v1033, 0
  %v1093 = vsel %vm1055, %v1041, 0
  %v1096 = vsel %vm1055, %v1049, 0
  %v1099 = vsel %vm1055, %v1048, 0
  %v1102 = vsel %vm1055, %v1050, 0
  %1104 = vmatprep.subr.bf16.mxu0 0
  %1105 = vmatpush1.bf16.msra.mxu0 0
  %1106 = vmatprep.subr.bf16.mxu0 0
  %1107 = vmatpush1.bf16.msra.mxu0 0
  %1108 = vmatprep.subr.bf16.mxu0 0
  %1109 = vmatpush1.bf16.msra.mxu0 0
  %1110 = vmatprep.subr.bf16.mxu0 0
  %1111 = vmatpush1.bf16.msra.mxu0 0
  %1112 = vmatprep.subr.bf16.mxu0 0
  %1113 = vmatpush1.bf16.msra.mxu0 0
  %1114 = vmatprep.subr.bf16.mxu0 0
  %1115 = vmatpush1.bf16.msra.mxu0 0
  %1116 = vmatprep.subr.bf16.mxu0 0
  %1117 = vmatpush1.bf16.msra.mxu0 0
  %1118 = vmatprep.subr.bf16.mxu0 %v1060
  %1119 = vmatpush1.bf16.msra.mxu0 %v1057
  %1120 = vmatprep.subr.bf16.mxu0 0
  %1121 = vmatpush2.bf16.msra.mxu0 0
  %1122 = vmatprep.subr.bf16.mxu0 0
  %1123 = vmatpush2.bf16.msra.mxu0 0
  %1124 = vmatprep.subr.bf16.mxu0 0
  %1125 = vmatpush2.bf16.msra.mxu0 0
  %1126 = vmatprep.subr.bf16.mxu0 0
  %1127 = vmatpush2.bf16.msra.mxu0 0
  %1128 = vmatprep.subr.bf16.mxu0 0
  %1129 = vmatpush2.bf16.msra.mxu0 0
  %1130 = vmatprep.subr.bf16.mxu0 0
  %1131 = vmatpush2.bf16.msra.mxu0 0
  %1132 = vmatprep.subr.bf16.mxu0 0
  %1133 = vmatpush2.bf16.msra.mxu0 0
  %1134 = vmatprep.subr.bf16.mxu0 0
  %1135 = vmatpush2.bf16.msra.mxu0 0
  %1136 = vmatprep.mubr.bf16.mxu0 0
  %1137 = vmatmul.mubr.bf16.gmra.mxu0 %v1053
  %v1138 = vpop.f32.mrf.mxu0
  %v1139 = vadd.f32 0.0, %v1138
  %v1140 = vpop.f32.mrf.mxu0
  %v1141 = vadd.f32 0.0, %v1140
  %v1142 = vpop.f32.mrf.mxu0
  %v1143 = vpop.f32.mrf.mxu0
  %1144 = vdwg.mxu0
  %1145 = vmatprep.subr.bf16.mxu0 0
  %1146 = vmatpush1.bf16.msra.mxu0 0
  %1147 = vmatprep.subr.bf16.mxu0 0
  %1148 = vmatpush1.bf16.msra.mxu0 0
  %1149 = vmatprep.subr.bf16.mxu0 0
  %1150 = vmatpush1.bf16.msra.mxu0 0
  %1151 = vmatprep.subr.bf16.mxu0 0
  %1152 = vmatpush1.bf16.msra.mxu0 0
  %1153 = vmatprep.subr.bf16.mxu0 0
  %1154 = vmatpush1.bf16.msra.mxu0 0
  %1155 = vmatprep.subr.bf16.mxu0 0
  %1156 = vmatpush1.bf16.msra.mxu0 0
  %1157 = vmatprep.subr.bf16.mxu0 0
  %1158 = vmatpush1.bf16.msra.mxu0 0
  %1159 = vmatprep.subr.bf16.mxu0 %v1066
  %1160 = vmatpush1.bf16.msra.mxu0 %v1063
  %1161 = vmatprep.subr.bf16.mxu0 0
  %1162 = vmatpush2.bf16.msra.mxu0 0
  %1163 = vmatprep.subr.bf16.mxu0 0
  %1164 = vmatpush2.bf16.msra.mxu0 0
  %1165 = vmatprep.subr.bf16.mxu0 0
  %1166 = vmatpush2.bf16.msra.mxu0 0
  %1167 = vmatprep.subr.bf16.mxu0 0
  %1168 = vmatpush2.bf16.msra.mxu0 0
  %1169 = vmatprep.subr.bf16.mxu0 0
  %1170 = vmatpush2.bf16.msra.mxu0 0
  %1171 = vmatprep.subr.bf16.mxu0 0
  %1172 = vmatpush2.bf16.msra.mxu0 0
  %1173 = vmatprep.subr.bf16.mxu0 0
  %1174 = vmatpush2.bf16.msra.mxu0 0
  %1175 = vmatprep.subr.bf16.mxu0 0
  %1176 = vmatpush2.bf16.msra.mxu0 0
  %1177 = vmatprep.mubr.bf16.mxu0 0
  %1178 = vmatmul.mubr.bf16.gmra.mxu0 %v1053
  %v1179 = vpop.f32.mrf.mxu0
  %v1180 = vadd.f32 0.0, %v1179
  %v1181 = vpop.f32.mrf.mxu0
  %v1182 = vadd.f32 0.0, %v1181
  %v1183 = vpop.f32.mrf.mxu0
  %v1184 = vpop.f32.mrf.mxu0
  %1185 = vdwg.mxu0
  %1186 = vmatprep.subr.bf16.mxu0 0
  %1187 = vmatpush1.bf16.msra.mxu0 0
  %1188 = vmatprep.subr.bf16.mxu0 0
  %1189 = vmatpush1.bf16.msra.mxu0 0
  %1190 = vmatprep.subr.bf16.mxu0 0
  %1191 = vmatpush1.bf16.msra.mxu0 0
  %1192 = vmatprep.subr.bf16.mxu0 0
  %1193 = vmatpush1.bf16.msra.mxu0 0
  %1194 = vmatprep.subr.bf16.mxu0 0
  %1195 = vmatpush1.bf16.msra.mxu0 0
  %1196 = vmatprep.subr.bf16.mxu0 0
  %1197 = vmatpush1.bf16.msra.mxu0 0
  %1198 = vmatprep.subr.bf16.mxu0 0
  %1199 = vmatpush1.bf16.msra.mxu0 0
  %1200 = vmatprep.subr.bf16.mxu0 %v1072
  %1201 = vmatpush1.bf16.msra.mxu0 %v1069
  %1202 = vmatprep.subr.bf16.mxu0 0
  %1203 = vmatpush2.bf16.msra.mxu0 0
  %1204 = vmatprep.subr.bf16.mxu0 0
  %1205 = vmatpush2.bf16.msra.mxu0 0
  %1206 = vmatprep.subr.bf16.mxu0 0
  %1207 = vmatpush2.bf16.msra.mxu0 0
  %1208 = vmatprep.subr.bf16.mxu0 0
  %1209 = vmatpush2.bf16.msra.mxu0 0
  %1210 = vmatprep.subr.bf16.mxu0 0
  %1211 = vmatpush2.bf16.msra.mxu0 0
  %1212 = vmatprep.subr.bf16.mxu0 0
  %1213 = vmatpush2.bf16.msra.mxu0 0
  %1214 = vmatprep.subr.bf16.mxu0 0
  %1215 = vmatpush2.bf16.msra.mxu0 0
  %1216 = vmatprep.subr.bf16.mxu0 0
  %1217 = vmatpush2.bf16.msra.mxu0 0
  %1218 = vmatprep.mubr.bf16.mxu0 0
  %1219 = vmatmul.mubr.bf16.gmra.mxu0 %v1053
  %v1220 = vpop.f32.mrf.mxu0
  %v1221 = vadd.f32 0.0, %v1220
  %v1222 = vpop.f32.mrf.mxu0
  %v1223 = vadd.f32 0.0, %v1222
  %v1224 = vpop.f32.mrf.mxu0
  %v1225 = vpop.f32.mrf.mxu0
  %1226 = vdwg.mxu0
  %1227 = vmatprep.subr.bf16.mxu0 0
  %1228 = vmatpush1.bf16.msra.mxu0 0
  %1229 = vmatprep.subr.bf16.mxu0 0
  %1230 = vmatpush1.bf16.msra.mxu0 0
  %1231 = vmatprep.subr.bf16.mxu0 0
  %1232 = vmatpush1.bf16.msra.mxu0 0
  %1233 = vmatprep.subr.bf16.mxu0 0
  %1234 = vmatpush1.bf16.msra.mxu0 0
  %1235 = vmatprep.subr.bf16.mxu0 0
  %1236 = vmatpush1.bf16.msra.mxu0 0
  %1237 = vmatprep.subr.bf16.mxu0 0
  %1238 = vmatpush1.bf16.msra.mxu0 0
  %1239 = vmatprep.subr.bf16.mxu0 0
  %1240 = vmatpush1.bf16.msra.mxu0 0
  %1241 = vmatprep.subr.bf16.mxu0 %v1078
  %1242 = vmatpush1.bf16.msra.mxu0 %v1075
  %1243 = vmatprep.subr.bf16.mxu0 0
  %1244 = vmatpush2.bf16.msra.mxu0 0
  %1245 = vmatprep.subr.bf16.mxu0 0
  %1246 = vmatpush2.bf16.msra.mxu0 0
  %1247 = vmatprep.subr.bf16.mxu0 0
  %1248 = vmatpush2.bf16.msra.mxu0 0
  %1249 = vmatprep.subr.bf16.mxu0 0
  %1250 = vmatpush2.bf16.msra.mxu0 0
  %1251 = vmatprep.subr.bf16.mxu0 0
  %1252 = vmatpush2.bf16.msra.mxu0 0
  %1253 = vmatprep.subr.bf16.mxu0 0
  %1254 = vmatpush2.bf16.msra.mxu0 0
  %1255 = vmatprep.subr.bf16.mxu0 0
  %1256 = vmatpush2.bf16.msra.mxu0 0
  %1257 = vmatprep.subr.bf16.mxu0 0
  %1258 = vmatpush2.bf16.msra.mxu0 0
  %1259 = vmatprep.mubr.bf16.mxu0 0
  %1260 = vmatmul.mubr.bf16.gmra.mxu0 %v1053
  %v1261 = vpop.f32.mrf.mxu0
  %v1262 = vadd.f32 0.0, %v1261
  %v1263 = vpop.f32.mrf.mxu0
  %v1264 = vadd.f32 0.0, %v1263
  %v1265 = vpop.f32.mrf.mxu0
  %v1266 = vpop.f32.mrf.mxu0
  %1267 = vdwg.mxu0
  %1268 = vmatprep.subr.bf16.mxu0 0
  %1269 = vmatpush1.bf16.msra.mxu0 0
  %1270 = vmatprep.subr.bf16.mxu0 0
  %1271 = vmatpush1.bf16.msra.mxu0 0
  %1272 = vmatprep.subr.bf16.mxu0 0
  %1273 = vmatpush1.bf16.msra.mxu0 0
  %1274 = vmatprep.subr.bf16.mxu0 0
  %1275 = vmatpush1.bf16.msra.mxu0 0
  %1276 = vmatprep.subr.bf16.mxu0 0
  %1277 = vmatpush1.bf16.msra.mxu0 0
  %1278 = vmatprep.subr.bf16.mxu0 0
  %1279 = vmatpush1.bf16.msra.mxu0 0
  %1280 = vmatprep.subr.bf16.mxu0 0
  %1281 = vmatpush1.bf16.msra.mxu0 0
  %1282 = vmatprep.subr.bf16.mxu0 %v1084
  %1283 = vmatpush1.bf16.msra.mxu0 %v1081
  %1284 = vmatprep.subr.bf16.mxu0 0
  %1285 = vmatpush2.bf16.msra.mxu0 0
  %1286 = vmatprep.subr.bf16.mxu0 0
  %1287 = vmatpush2.bf16.msra.mxu0 0
  %1288 = vmatprep.subr.bf16.mxu0 0
  %1289 = vmatpush2.bf16.msra.mxu0 0
  %1290 = vmatprep.subr.bf16.mxu0 0
  %1291 = vmatpush2.bf16.msra.mxu0 0
  %1292 = vmatprep.subr.bf16.mxu0 0
  %1293 = vmatpush2.bf16.msra.mxu0 0
  %1294 = vmatprep.subr.bf16.mxu0 0
  %1295 = vmatpush2.bf16.msra.mxu0 0
  %1296 = vmatprep.subr.bf16.mxu0 0
  %1297 = vmatpush2.bf16.msra.mxu0 0
  %1298 = vmatprep.subr.bf16.mxu0 0
  %1299 = vmatpush2.bf16.msra.mxu0 0
  %1300 = vmatprep.mubr.bf16.mxu0 0
  %1301 = vmatmul.mubr.bf16.gmra.mxu0 %v1053
  %v1302 = vpop.f32.mrf.mxu0
  %v1303 = vadd.f32 0.0, %v1302
  %v1304 = vpop.f32.mrf.mxu0
  %v1305 = vadd.f32 0.0, %v1304
  %v1306 = vpop.f32.mrf.mxu0
  %v1307 = vpop.f32.mrf.mxu0
  %1308 = vdwg.mxu0
  %1309 = vmatprep.subr.bf16.mxu0 0
  %1310 = vmatpush1.bf16.msra.mxu0 0
  %1311 = vmatprep.subr.bf16.mxu0 0
  %1312 = vmatpush1.bf16.msra.mxu0 0
  %1313 = vmatprep.subr.bf16.mxu0 0
  %1314 = vmatpush1.bf16.msra.mxu0 0
  %1315 = vmatprep.subr.bf16.mxu0 0
  %1316 = vmatpush1.bf16.msra.mxu0 0
  %1317 = vmatprep.subr.bf16.mxu0 0
  %1318 = vmatpush1.bf16.msra.mxu0 0
  %1319 = vmatprep.subr.bf16.mxu0 0
  %1320 = vmatpush1.bf16.msra.mxu0 0
  %1321 = vmatprep.subr.bf16.mxu0 0
  %1322 = vmatpush1.bf16.msra.mxu0 0
  %1323 = vmatprep.subr.bf16.mxu0 %v1090
  %1324 = vmatpush1.bf16.msra.mxu0 %v1087
  %1325 = vmatprep.subr.bf16.mxu0 0
  %1326 = vmatpush2.bf16.msra.mxu0 0
  %1327 = vmatprep.subr.bf16.mxu0 0
  %1328 = vmatpush2.bf16.msra.mxu0 0
  %1329 = vmatprep.subr.bf16.mxu0 0
  %1330 = vmatpush2.bf16.msra.mxu0 0
  %1331 = vmatprep.subr.bf16.mxu0 0
  %1332 = vmatpush2.bf16.msra.mxu0 0
  %1333 = vmatprep.subr.bf16.mxu0 0
  %1334 = vmatpush2.bf16.msra.mxu0 0
  %1335 = vmatprep.subr.bf16.mxu0 0
  %1336 = vmatpush2.bf16.msra.mxu0 0
  %1337 = vmatprep.subr.bf16.mxu0 0
  %1338 = vmatpush2.bf16.msra.mxu0 0
  %1339 = vmatprep.subr.bf16.mxu0 0
  %1340 = vmatpush2.bf16.msra.mxu0 0
  %1341 = vmatprep.mubr.bf16.mxu0 0
  %1342 = vmatmul.mubr.bf16.gmra.mxu0 %v1053
  %v1343 = vpop.f32.mrf.mxu0
  %v1344 = vadd.f32 0.0, %v1343
  %v1345 = vpop.f32.mrf.mxu0
  %v1346 = vadd.f32 0.0, %v1345
  %v1347 = vpop.f32.mrf.mxu0
  %v1348 = vpop.f32.mrf.mxu0
  %1349 = vdwg.mxu0
  %1350 = vmatprep.subr.bf16.mxu0 0
  %1351 = vmatpush1.bf16.msra.mxu0 0
  %1352 = vmatprep.subr.bf16.mxu0 0
  %1353 = vmatpush1.bf16.msra.mxu0 0
  %1354 = vmatprep.subr.bf16.mxu0 0
  %1355 = vmatpush1.bf16.msra.mxu0 0
  %1356 = vmatprep.subr.bf16.mxu0 0
  %1357 = vmatpush1.bf16.msra.mxu0 0
  %1358 = vmatprep.subr.bf16.mxu0 0
  %1359 = vmatpush1.bf16.msra.mxu0 0
  %1360 = vmatprep.subr.bf16.mxu0 0
  %1361 = vmatpush1.bf16.msra.mxu0 0
  %1362 = vmatprep.subr.bf16.mxu0 0
  %1363 = vmatpush1.bf16.msra.mxu0 0
  %1364 = vmatprep.subr.bf16.mxu0 %v1096
  %1365 = vmatpush1.bf16.msra.mxu0 %v1093
  %1366 = vmatprep.subr.bf16.mxu0 0
  %1367 = vmatpush2.bf16.msra.mxu0 0
  %1368 = vmatprep.subr.bf16.mxu0 0
  %1369 = vmatpush2.bf16.msra.mxu0 0
  %1370 = vmatprep.subr.bf16.mxu0 0
  %1371 = vmatpush2.bf16.msra.mxu0 0
  %1372 = vmatprep.subr.bf16.mxu0 0
  %1373 = vmatpush2.bf16.msra.mxu0 0
  %1374 = vmatprep.subr.bf16.mxu0 0
  %1375 = vmatpush2.bf16.msra.mxu0 0
  %1376 = vmatprep.subr.bf16.mxu0 0
  %1377 = vmatpush2.bf16.msra.mxu0 0
  %1378 = vmatprep.subr.bf16.mxu0 0
  %1379 = vmatpush2.bf16.msra.mxu0 0
  %1380 = vmatprep.subr.bf16.mxu0 0
  %1381 = vmatpush2.bf16.msra.mxu0 0
  %1382 = vmatprep.mubr.bf16.mxu0 0
  %1383 = vmatmul.mubr.bf16.gmra.mxu0 %v1053
  %v1384 = vpop.f32.mrf.mxu0
  %v1385 = vadd.f32 0.0, %v1384
  %v1386 = vpop.f32.mrf.mxu0
  %v1387 = vadd.f32 0.0, %v1386
  %v1388 = vpop.f32.mrf.mxu0
  %v1389 = vpop.f32.mrf.mxu0
  %1390 = vdwg.mxu0
  %1391 = vmatprep.subr.bf16.mxu0 0
  %1392 = vmatpush1.bf16.msra.mxu0 0
  %1393 = vmatprep.subr.bf16.mxu0 0
  %1394 = vmatpush1.bf16.msra.mxu0 0
  %1395 = vmatprep.subr.bf16.mxu0 0
  %1396 = vmatpush1.bf16.msra.mxu0 0
  %1397 = vmatprep.subr.bf16.mxu0 0
  %1398 = vmatpush1.bf16.msra.mxu0 0
  %1399 = vmatprep.subr.bf16.mxu0 0
  %1400 = vmatpush1.bf16.msra.mxu0 0
  %1401 = vmatprep.subr.bf16.mxu0 0
  %1402 = vmatpush1.bf16.msra.mxu0 0
  %1403 = vmatprep.subr.bf16.mxu0 0
  %1404 = vmatpush1.bf16.msra.mxu0 0
  %1405 = vmatprep.subr.bf16.mxu0 %v1102
  %1406 = vmatpush1.bf16.msra.mxu0 %v1099
  %1407 = vmatprep.subr.bf16.mxu0 0
  %1408 = vmatpush2.bf16.msra.mxu0 0
  %1409 = vmatprep.subr.bf16.mxu0 0
  %1410 = vmatpush2.bf16.msra.mxu0 0
  %1411 = vmatprep.subr.bf16.mxu0 0
  %1412 = vmatpush2.bf16.msra.mxu0 0
  %1413 = vmatprep.subr.bf16.mxu0 0
  %1414 = vmatpush2.bf16.msra.mxu0 0
  %1415 = vmatprep.subr.bf16.mxu0 0
  %1416 = vmatpush2.bf16.msra.mxu0 0
  %1417 = vmatprep.subr.bf16.mxu0 0
  %1418 = vmatpush2.bf16.msra.mxu0 0
  %1419 = vmatprep.subr.bf16.mxu0 0
  %1420 = vmatpush2.bf16.msra.mxu0 0
  %1421 = vmatprep.subr.bf16.mxu0 0
  %1422 = vmatpush2.bf16.msra.mxu0 0
  %1423 = vmatprep.mubr.bf16.mxu0 0
  %1424 = vmatmul.mubr.bf16.gmra.mxu0 %v1053
  %v1425 = vpop.f32.mrf.mxu0
  %v1426 = vadd.f32 0.0, %v1425
  %v1427 = vpop.f32.mrf.mxu0
  %v1428 = vadd.f32 0.0, %v1427
  %v1429 = vpop.f32.mrf.mxu0
  %v1430 = vpop.f32.mrf.mxu0
  %1431 = vdwg.mxu0
  %v1432 = vadd.f32 %v1139, %v1141
  %v1433 = vadd.f32 %v1432, %v1180
  %v1434 = vadd.f32 %v1433, %v1182
  %v1435 = vadd.f32 %v1434, %v1221
  %v1436 = vadd.f32 %v1435, %v1223
  %v1437 = vadd.f32 %v1436, %v1262
  %v1438 = vadd.f32 %v1437, %v1264
  %v1439 = vadd.f32 %v1438, %v1303
  %v1440 = vadd.f32 %v1439, %v1305
  %v1441 = vadd.f32 %v1440, %v1344
  %v1442 = vadd.f32 %v1441, %v1346
  %v1443 = vadd.f32 %v1442, %v1385
  %v1444 = vadd.f32 %v1443, %v1387
  %v1445 = vadd.f32 %v1444, %v1426
  %v1446 = vadd.f32 %v1445, %v1428
  %1447 = vadd.xlane.f32.xlu0 %v1446
  %v1448 = vpop.xlane.xlu0 %1447
  %v1449 = vmul.f32 %v1448, 0.00048828125
  %v1450 = vsub.f32 %v1139, %v1449
  %v1451 = vsub.f32 %v1141, %v1449
  %v1452 = vsub.f32 %v1180, %v1449
  %v1453 = vsub.f32 %v1182, %v1449
  %v1454 = vsub.f32 %v1221, %v1449
  %v1455 = vsub.f32 %v1223, %v1449
  %v1456 = vsub.f32 %v1262, %v1449
  %v1457 = vsub.f32 %v1264, %v1449
  %v1458 = vsub.f32 %v1303, %v1449
  %v1459 = vsub.f32 %v1305, %v1449
  %v1460 = vsub.f32 %v1344, %v1449
  %v1461 = vsub.f32 %v1346, %v1449
  %v1462 = vsub.f32 %v1385, %v1449
  %v1463 = vsub.f32 %v1387, %v1449
  %v1464 = vsub.f32 %v1426, %v1449
  %v1465 = vsub.f32 %v1428, %v1449
  %v1466 = vmul.f32 %v1450, %v1450
  %v1467 = vmul.f32 %v1451, %v1451
  %v1468 = vmul.f32 %v1452, %v1452
  %v1469 = vmul.f32 %v1453, %v1453
  %v1470 = vmul.f32 %v1454, %v1454
  %v1471 = vmul.f32 %v1455, %v1455
  %v1472 = vmul.f32 %v1456, %v1456
  %v1473 = vmul.f32 %v1457, %v1457
  %v1474 = vmul.f32 %v1458, %v1458
  %v1475 = vmul.f32 %v1459, %v1459
  %v1476 = vmul.f32 %v1460, %v1460
  %v1477 = vmul.f32 %v1461, %v1461
  %v1478 = vmul.f32 %v1462, %v1462
  %v1479 = vmul.f32 %v1463, %v1463
  %v1480 = vmul.f32 %v1464, %v1464
  %v1481 = vmul.f32 %v1465, %v1465
  %v1482 = vadd.f32 %v1466, %v1467
  %v1483 = vadd.f32 %v1482, %v1468
  %v1484 = vadd.f32 %v1483, %v1469
  %v1485 = vadd.f32 %v1484, %v1470
  %v1486 = vadd.f32 %v1485, %v1471
  %v1487 = vadd.f32 %v1486, %v1472
  %v1488 = vadd.f32 %v1487, %v1473
  %v1489 = vadd.f32 %v1488, %v1474
  %v1490 = vadd.f32 %v1489, %v1475
  %v1491 = vadd.f32 %v1490, %v1476
  %v1492 = vadd.f32 %v1491, %v1477
  %v1493 = vadd.f32 %v1492, %v1478
  %v1494 = vadd.f32 %v1493, %v1479
  %v1495 = vadd.f32 %v1494, %v1480
  %v1496 = vadd.f32 %v1495, %v1481
  %1497 = vadd.xlane.f32.xlu0 %v1496
  %v1498 = vpop.xlane.xlu0 %1497
  %v1499 = vmul.f32 %v1498, 0.00048828125
  %v1500 = vadd.f32 %v1499, 1e-05
  %v1501 = vrsqrt.pop %v1500
  %v1502 = vmul.f32 %v1450, %v1501
  %v1503 = vmul.f32 %v1451, %v1501
  %v1504 = vmul.f32 %v1452, %v1501
  %v1505 = vmul.f32 %v1453, %v1501
  %v1506 = vmul.f32 %v1454, %v1501
  %v1507 = vmul.f32 %v1455, %v1501
  %v1508 = vmul.f32 %v1456, %v1501
  %v1509 = vmul.f32 %v1457, %v1501
  %v1510 = vmul.f32 %v1458, %v1501
  %v1511 = vmul.f32 %v1459, %v1501
  %v1512 = vmul.f32 %v1460, %v1501
  %v1513 = vmul.f32 %v1461, %v1501
  %v1514 = vmul.f32 %v1462, %v1501
  %v1515 = vmul.f32 %v1463, %v1501
  %v1516 = vmul.f32 %v1464, %v1501
  %v1517 = vmul.f32 %v1465, %v1501
  %v1518 = vld [vmem:[%s6] sm:$0xff]
  %1520 = vset.pattern.permute.xlu0 0
  %1521 = vperm.xlu0 %1520, %v1518
  %v1522 = vpop.permute.xlu0 %1521
  %v1524 = vmul.f32 %v1502, %v1522
  %v1525 = vmul.f32 %v1503, %v1522
  %v1526 = vmul.f32 %v1504, %v1522
  %v1527 = vmul.f32 %v1505, %v1522
  %v1528 = vmul.f32 %v1506, %v1522
  %v1529 = vmul.f32 %v1507, %v1522
  %v1530 = vmul.f32 %v1508, %v1522
  %v1531 = vmul.f32 %v1509, %v1522
  %v1532 = vmul.f32 %v1510, %v1522
  %v1533 = vmul.f32 %v1511, %v1522
  %v1534 = vmul.f32 %v1512, %v1522
  %v1535 = vmul.f32 %v1513, %v1522
  %v1536 = vmul.f32 %v1514, %v1522
  %v1537 = vmul.f32 %v1515, %v1522
  %v1538 = vmul.f32 %v1516, %v1522
  %v1539 = vmul.f32 %v1517, %v1522
  %v1540 = vld [vmem:[%s7] sm:$0xff]
  %1542 = vset.pattern.permute.xlu0 0
  %1543 = vperm.xlu0 %1542, %v1540
  %v1544 = vpop.permute.xlu0 %1543
  %v1546 = vadd.f32 %v1524, %v1544
  %v1547 = vadd.f32 %v1525, %v1544
  %v1548 = vadd.f32 %v1526, %v1544
  %v1549 = vadd.f32 %v1527, %v1544
  %v1550 = vadd.f32 %v1528, %v1544
  %v1551 = vadd.f32 %v1529, %v1544
  %v1552 = vadd.f32 %v1530, %v1544
  %v1553 = vadd.f32 %v1531, %v1544
  %v1554 = vadd.f32 %v1532, %v1544
  %v1555 = vadd.f32 %v1533, %v1544
  %v1556 = vadd.f32 %v1534, %v1544
  %v1557 = vadd.f32 %v1535, %v1544
  %v1558 = vadd.f32 %v1536, %v1544
  %v1559 = vadd.f32 %v1537, %v1544
  %v1560 = vadd.f32 %v1538, %v1544
  %v1561 = vadd.f32 %v1539, %v1544
  %v1562 = vadd.f32 %v958, %v1546
  %v1563 = vadd.f32 %v959, %v1547
  %v1564 = vadd.f32 %v960, %v1548
  %v1565 = vadd.f32 %v961, %v1549
  %v1566 = vadd.f32 %v962, %v1550
  %v1567 = vadd.f32 %v963, %v1551
  %v1568 = vadd.f32 %v964, %v1552
  %v1569 = vadd.f32 %v965, %v1553
  %v1570 = vadd.f32 %v966, %v1554
  %v1571 = vadd.f32 %v967, %v1555
  %v1572 = vadd.f32 %v968, %v1556
  %v1573 = vadd.f32 %v969, %v1557
  %v1574 = vadd.f32 %v970, %v1558
  %v1575 = vadd.f32 %v971, %v1559
  %v1576 = vadd.f32 %v972, %v1560
  %v1577 = vadd.f32 %v973, %v1561
  %v1578 = vmax.f32 %v1562, 0.0
  %v1579 = vmax.f32 %v1563, 0.0
  %v1580 = vmax.f32 %v1564, 0.0
  %v1581 = vmax.f32 %v1565, 0.0
  %v1582 = vmax.f32 %v1566, 0.0
  %v1583 = vmax.f32 %v1567, 0.0
  %v1584 = vmax.f32 %v1568, 0.0
  %v1585 = vmax.f32 %v1569, 0.0
  %v1586 = vmax.f32 %v1570, 0.0
  %v1587 = vmax.f32 %v1571, 0.0
  %v1588 = vmax.f32 %v1572, 0.0
  %v1589 = vmax.f32 %v1573, 0.0
  %v1590 = vmax.f32 %v1574, 0.0
  %v1591 = vmax.f32 %v1575, 0.0
  %v1592 = vmax.f32 %v1576, 0.0
  %v1593 = vmax.f32 %v1577, 0.0
  %1594 = vst [vmem:[%s8] sm:$0xff] %v1578
  %1595 = vst [vmem:[%s8 + $0x8] sm:$0xff] %v1579
  %1596 = vst [vmem:[%s8 + $0x10] sm:$0xff] %v1580
  %1597 = vst [vmem:[%s8 + $0x18] sm:$0xff] %v1581
  %1598 = vst [vmem:[%s8 + $0x20] sm:$0xff] %v1582
  %1599 = vst [vmem:[%s8 + $0x28] sm:$0xff] %v1583
  %1600 = vst [vmem:[%s8 + $0x30] sm:$0xff] %v1584
  %1601 = vst [vmem:[%s8 + $0x38] sm:$0xff] %v1585
  %1602 = vst [vmem:[%s8 + $0x40] sm:$0xff] %v1586
  %1603 = vst [vmem:[%s8 + $0x48] sm:$0xff] %v1587
  %1604 = vst [vmem:[%s8 + $0x50] sm:$0xff] %v1588
  %1605 = vst [vmem:[%s8 + $0x58] sm:$0xff] %v1589
  %1606 = vst [vmem:[%s8 + $0x60] sm:$0xff] %v1590
  %1607 = vst [vmem:[%s8 + $0x68] sm:$0xff] %v1591
  %1608 = vst [vmem:[%s8 + $0x70] sm:$0xff] %v1592
  %1609 = vst [vmem:[%s8 + $0x78] sm:$0xff] %v1593
  // Predicated region
  $region34: #{upsample_block.3} parent=0 // pred_check
    _
  $region35: #{upsample_block.3} parent=0 // pred_check_branch
    %1611 = sbr.rel (0) target = $region37
  $region36: #{upsample_block.3} parent=0 // pred_region
    _
  $region37: #{upsample_block.3} parent=0 // pred_fallthru
    _
  // Predicated region
  $region38: #{upsample_block.3} parent=0 // pred_check
    _
  $region39: #{upsample_block.3} parent=0 // pred_check_branch
    %1613 = sbr.rel (0) target = $region41
  $region40: #{upsample_block.3} parent=0 // pred_region
    _
  $region41: #{upsample_block.3} parent=0 // pred_fallthru
    _

</llo_original>
